<compile_context>
chip_gen: v7x
topology: tpu7x:2x2x1
jax: 0.10.0
libtpu: 0.0.40
codegen_flags: <defaults>
</compile_context>

<pallas_src>
import functools

import jax
import jax.numpy as jnp
from jax.experimental import pallas as pl
from jax.experimental.pallas import tpu as pltpu


# ----------------------- configuration (mirrors CSDI_base.__init__) -----------------------
CONFIG = {
    "model": {
        "timeemb": 32,        # unused: the truncated train forward never builds side_info
        "featureemb": 16,     # unused: same reason
        "is_unconditional": False,
        "target_strategy": "random",
    },
    "diffusion": {
        "num_steps": 50,
        "beta_start": 1e-4,
        "beta_end": 0.5,
        "schedule": "quad",
        "channels": 64,       # hidden channels of the diff_CSDI stand-in
        "diff_emb_dim": 128,  # diffusion step embedding dim
    },
}


def _round_up(x, m):
    return ((x + m - 1) // m) * m


def make_beta_schedule(cfg_diff):
    n = cfg_diff["num_steps"]
    if cfg_diff["schedule"] == "quad":
        beta = jnp.linspace(cfg_diff["beta_start"] ** 0.5, cfg_diff["beta_end"] ** 0.5, n) ** 2
    else:  # 'linear'
        beta = jnp.linspace(cfg_diff["beta_start"], cfg_diff["beta_end"], n)
    alpha = 1.0 - beta
    alpha_hat = jnp.cumprod(alpha)
    return (beta.astype(jnp.float32), alpha.astype(jnp.float32), alpha_hat.astype(jnp.float32))


def init_params(key, target_dim, cfg):
    C = cfg["diffusion"]["channels"]
    E = cfg["diffusion"]["diff_emb_dim"]
    feat = cfg["model"]["featureemb"]
    ks = jax.random.split(key, 8)

    def dense(k, fan_in, shape):
        return (jax.random.normal(k, shape, jnp.float32) / jnp.sqrt(float(fan_in))).astype(jnp.float32)

    return {
        # nn.Embedding(target_dim, featureemb) -- kept for parity with __init__;
        # unused because this forward path never constructs side_info.
        "embed_layer": dense(ks[0], 1.0, (target_dim, feat)),
        # TODO(synk): diff_CSDI source is not provided; this is a CSDI-style stand-in
        # (sinusoidal diffusion-step embedding + SiLU MLP + 1x1 in/out conv projections),
        # not the full residual-transformer stack.
        "emb_w1": dense(ks[1], E, (E, E)),
        "emb_b1": jnp.zeros((E,), jnp.float32),
        "emb_w2": dense(ks[2], E, (E, E)),
        "emb_b2": jnp.zeros((E,), jnp.float32),
        "emb_proj": dense(ks[3], E, (E, C)),
        "emb_proj_b": jnp.zeros((C,), jnp.float32),
        "w_in": dense(ks[4], 2.0, (C, 2)),     # 1x1 conv: input_dim=2 (cond, noisy) -> C
        "b_in": jnp.zeros((C, 1), jnp.float32),
        "w_out": dense(ks[5], C, (1, C)),      # 1x1 conv: C -> 1
        "b_out": jnp.zeros((1,), jnp.float32),
    }


def diffusion_step_embedding(t, params, cfg):
    """CSDI-style diffusion-step embedding (tiny glue, stays in plain JAX)."""
    E = cfg["diffusion"]["diff_emb_dim"]
    half = E // 2
    tf = t.astype(jnp.float32)
    freqs = 10.0 ** (jnp.arange(half, dtype=jnp.float32) * 4.0 / (half - 1))
    x = tf[:, None] * freqs[None, :]
    emb = jnp.concatenate([jnp.sin(x), jnp.cos(x)], axis=-1)            # (B, E)
    emb = jax.nn.silu(emb @ params["emb_w1"] + params["emb_b1"])
    emb = jax.nn.silu(emb @ params["emb_w2"] + params["emb_b2"])
    emb = emb @ params["emb_proj"] + params["emb_proj_b"]               # (B, C)
    return emb.astype(jnp.float32)


# --------------------------------- Pallas kernel ---------------------------------
def _csdi_tile_kernel(b_valid, kl_valid, mask_rows, mask_lanes,
                      sa_ref, sb_ref, bout_ref,
                      obs_ref, eps_ref, emb_ref, w_in_ref, w_out_ref,
                      psum_ref):
    """One grid step = (tb batch rows) x (lc lanes of K*L); emits a masked partial
    sum of the squared error as an (8, lc) lane-dense block (all sublanes identical)."""
    tb, lc = obs_ref.shape
    n_groups = tb // 8
    row_base = pl.program_id(0) * tb
    lane_base = pl.program_id(1) * lc

    # Loop-invariant operands hoisted out of the loops.
    w0 = w_in_ref[:, 0:1]          # (C, 1)  weight of cond_obs channel
    w1 = w_in_ref[:, 1:2]          # (C, 1)  weight of noisy_target channel
    w_out = w_out_ref[...]         # (1, C)
    b_out = bout_ref[0]            # scalar (SMEM)

    if mask_lanes:
        lane_ok = (lane_base
                   + jax.lax.broadcasted_iota(jnp.int32, (1, lc), 1)) < kl_valid

    def group_body(g, acc):
        r0 = pl.multiple_of(g * 8, 8)
        obs8 = obs_ref[pl.ds(r0, 8), :]                # (8, lc) dense load
        eps8 = eps_ref[pl.ds(r0, 8), :]                # (8, lc) dense load
        for r in range(8):                             # bounded unroll (8 rows)
            row_g = row_base + r0 + r                  # global batch row
            obs_r = obs8[r:r + 1, :]                   # (1, lc) register slice
            eps_r = eps8[r:r + 1, :]                   # (1, lc)

            # noise_images: sqrt(alpha_hat[t]) * x + sqrt(1 - alpha_hat[t]) * eps  (VPU)
            noisy_r = sa_ref[row_g] * obs_r + sb_ref[row_g] * eps_r

            # set_input_to_diffmodel (is_unconditional=False): [cond_obs, noisy_target]
            # diff_CSDI stand-in: 1x1 input conv (2->C) + step embedding (b_in folded) + ReLU
            emb_c = emb_ref[g, :, r:r + 1]             # (C, 1) per-row step embedding
            h = obs_r * w0 + noisy_r * w1 + emb_c      # (C, lc)
            h = jnp.maximum(h, 0.0)

            # 1x1 output conv (C -> 1): MXU matmul
            pred = jnp.dot(w_out, h, preferred_element_type=jnp.float32) + b_out  # (1, lc)

            # masked squared error (padded rows / padded lanes contribute 0)
            d = eps_r - pred
            sq = d * d
            if mask_lanes:
                sq = jnp.where(lane_ok, sq, 0.0)
            if mask_rows:
                sq = sq * (row_g < b_valid).astype(jnp.float32)
            acc = acc + sq
        return acc

    acc = jax.lax.fori_loop(0, n_groups, group_body,
                            jnp.zeros((1, lc), jnp.float32))
    # Lane-dense unmasked store; all 8 sublanes carry the same partial sum,
    # the wrapper reads sublane 0 of each block.
    psum_ref[...] = jnp.broadcast_to(acc, (8, lc))


def csdi_train_loss(observed_data, eps, t, params, alpha_hat, cfg, tb=None):
    """forward(batch, is_train=1) -> calc_loss training branch."""
    B, K, L = observed_data.shape
    KL = K * L
    C = cfg["diffusion"]["channels"]

    # ---- lane tiling of K*L: 128-aligned, streamed in <=256-lane chunks so the per-row
    #      (C, chunk) intermediate stays <= ~16 vregs even for large K*L ----
    if KL <= 256:
        KLp = _round_up(KL, 128)
        lc = KLp
    else:
        lc = 256
        KLp = _round_up(KL, lc)
    n_lane = KLp // lc

    # ---- batch tiling: one tile for small batches, 256-row tiles for big ones
    #      (for v7x prefer batch sizes giving >= 8 grid steps so both TCs pipeline) ----
    if tb is None:
        b8 = _round_up(B, 8)
        tb = b8 if b8 <= 256 else 256
    assert tb % 8 == 0
    b_pad = _round_up(B, tb)
    nb = b_pad // tb
    pad_b = b_pad - B
    pad_l = KLp - KL

    # per-batch diffusion-schedule scalars (flat 1-D -> no 2-D SMEM lane padding)
    s_ah = jnp.pad(jnp.sqrt(alpha_hat[t]).astype(jnp.float32), (0, pad_b))        # (b_pad,)
    s_1m = jnp.pad(jnp.sqrt(1.0 - alpha_hat[t]).astype(jnp.float32), (0, pad_b))  # (b_pad,)

    # diffusion-step embedding with the input-conv bias folded in (one fewer operand);
    # grouped layout (nb, tb//8, C, 8): per 8-row group one (C, 8) slab, channels on
    # sublanes -> no lane-dim-1 blocks, no 128x VMEM inflation.
    emb = diffusion_step_embedding(t, params, cfg) + params["b_in"][:, 0][None, :]  # (B, C)
    emb = jnp.pad(emb, ((0, pad_b), (0, 0)))                                        # (b_pad, C)
    emb4 = emb.reshape(nb, tb // 8, 8, C).transpose(0, 1, 3, 2)                     # (nb, tb//8, C, 8)

    obs2d = jnp.pad(observed_data.reshape(B, KL).astype(jnp.float32), ((0, pad_b), (0, pad_l)))
    eps2d = jnp.pad(eps.reshape(B, KL).astype(jnp.float32), ((0, pad_b), (0, pad_l)))

    kernel = functools.partial(_csdi_tile_kernel, B, KL, pad_b > 0, pad_l > 0)

    # VMEM budget: double-buffered obs/eps/emb/out blocks + weights, with 2x headroom.
    vmem_need = 4 * (2 * 2 * tb * lc                 # obs + eps blocks, double buffered
                     + 2 * (tb // 8) * C * 128       # emb block (lanes padded to 128)
                     + 2 * 8 * lc                    # output partial-sum block
                     + 2 * (C * 128 + 128))          # w_in / w_out (lane padded)
    vmem_limit = int(min(max(2 * vmem_need, 8 << 20), 100 << 20))

    psum = pl.pallas_call(
        kernel,
        out_shape=jax.ShapeDtypeStruct((nb * 8, KLp), jnp.float32),
        grid=(nb, n_lane),
        in_specs=[
            pl.BlockSpec(memory_space=pltpu.MemorySpace.SMEM),        # sqrt(alpha_hat)      (b_pad,)
            pl.BlockSpec(memory_space=pltpu.MemorySpace.SMEM),        # sqrt(1 - alpha_hat)  (b_pad,)
            pl.BlockSpec(memory_space=pltpu.MemorySpace.SMEM),        # b_out                (1,)
            pl.BlockSpec((tb, lc), lambda i, j: (i, j)),              # observed rows
            pl.BlockSpec((tb, lc), lambda i, j: (i, j)),              # noise eps rows
            pl.BlockSpec((None, tb // 8, C, 8), lambda i, j: (i, 0, 0, 0)),  # step emb (+b_in)
            pl.BlockSpec((C, 2), lambda i, j: (0, 0)),                # w_in   (resident)
            pl.BlockSpec((1, C), lambda i, j: (0, 0)),                # w_out  (resident)
        ],
        out_specs=pl.BlockSpec((8, lc), lambda i, j: (i, j)),         # lane-dense partial sums
        compiler_params=pltpu.CompilerParams(
            dimension_semantics=("parallel", "parallel"),
            vmem_limit_bytes=vmem_limit),
    )(s_ah, s_1m, params["b_out"], obs2d, eps2d, emb4, params["w_in"], params["w_out"])

    # mse(noise, predicted.permute(0,2,1)); sublane 0 of each block holds the partial sum,
    # padded rows/lanes were masked in-kernel.
    total = jnp.sum(psum.reshape(nb, 8, KLp)[:, 0, :])
    return total / (B * K * L)


# ------------------------------- pure-JAX reference -------------------------------
def reference_loss(observed_data, eps, t, params, alpha_hat, cfg):
    B, K, L = observed_data.shape
    KL = K * L
    s_ah = jnp.sqrt(alpha_hat[t])[:, None, None]
    s_1m = jnp.sqrt(1.0 - alpha_hat[t])[:, None, None]
    noisy = s_ah * observed_data + s_1m * eps
    emb = diffusion_step_embedding(t, params, cfg)               # (B, C)
    obs_f = observed_data.reshape(B, KL)
    noisy_f = noisy.reshape(B, KL)
    h = (params["w_in"][None, :, 0:1] * obs_f[:, None, :]
         + params["w_in"][None, :, 1:2] * noisy_f[:, None, :]
         + params["b_in"][None, :, :]
         + emb[:, :, None])                                      # (B, C, KL)
    h = jnp.maximum(h, 0.0)
    pred = jnp.einsum("oc,bck->bk", params["w_out"], h) + params["b_out"][0]
    return jnp.mean((eps.reshape(B, KL) - pred) ** 2)


if __name__ == "__main__":
    cfg = CONFIG
    B, K, L = 10, 8, 16           # batch, features (target_dim), length  -> K*L = 128
    target_dim = K

    beta, alpha, alpha_hat = make_beta_schedule(cfg["diffusion"])
    params = init_params(jax.random.PRNGKey(42), target_dim, cfg)

    key = jax.random.PRNGKey(0)
    k_data, k_t, k_eps = jax.random.split(key, 3)
    observed_data = jax.random.normal(k_data, (B, K, L), jnp.float32)
    # train path (is_train=1): t ~ randint(0, num_steps, [B]); eps ~ randn_like(x)
    t = jax.random.randint(k_t, (B,), 0, cfg["diffusion"]["num_steps"])
    eps = jax.random.normal(k_eps, (B, K, L), jnp.float32)

    ref = reference_loss(observed_data, eps, t, params, alpha_hat, cfg)

    # default tiling: one large batch tile (single grid step), row padding masked in-kernel
    loss = csdi_train_loss(observed_data, eps, t, params, alpha_hat, cfg)
    loss = jax.block_until_ready(loss)
    assert jnp.allclose(loss, ref, rtol=1e-4, atol=1e-5), (loss, ref)

    # multi-step grid path (explicit small tile): exercises program_id offsets + masking
    loss2 = csdi_train_loss(observed_data, eps, t, params, alpha_hat, cfg, tb=8)
    loss2 = jax.block_until_ready(loss2)
    assert jnp.allclose(loss2, ref, rtol=1e-4, atol=1e-5), (loss2, ref)

    print("KERNEL_OK")
</pallas_src>

<mosaic_0001>
module attributes {stable_mosaic.version = 11 : i64} {
  func.func @_csdi_tile_kernel(%arg0: i32, %arg1: i32, %arg2: memref<16xf32, #tpu.memory_space<smem>>, %arg3: memref<16xf32, #tpu.memory_space<smem>>, %arg4: memref<1xf32, #tpu.memory_space<smem>>, %arg5: memref<16x128xf32, #tpu.memory_space<vmem>>, %arg6: memref<16x128xf32, #tpu.memory_space<vmem>>, %arg7: memref<1x2x64x8xf32, #tpu.memory_space<vmem>>, %arg8: memref<64x2xf32, #tpu.memory_space<vmem>>, %arg9: memref<1x64xf32, #tpu.memory_space<vmem>>, %arg10: memref<8x128xf32, #tpu.memory_space<vmem>>) attributes {dimension_semantics = [#tpu.dimension_semantics<parallel>, #tpu.dimension_semantics<parallel>], iteration_bounds = array<i64: 1, 1>, scalar_prefetch = 0 : i64, scratch_operands = 0 : i64, tpu.core_type = #tpu.core_type<tc>, window_params = [{transform_indices = @transform_0, window_bounds = array<i64: 16>}, {transform_indices = @transform_1, window_bounds = array<i64: 16>}, {transform_indices = @transform_2, window_bounds = array<i64: 1>}, {transform_indices = @transform_3, window_bounds = array<i64: 16, 128>}, {transform_indices = @transform_4, window_bounds = array<i64: 16, 128>}, {transform_indices = @transform_5, window_bounds = array<i64: 1, 2, 64, 8>}, {pipeline_mode = #tpu.pipeline_mode<synchronous>, transform_indices = @transform_6, window_bounds = array<i64: 64, 2>}, {pipeline_mode = #tpu.pipeline_mode<synchronous>, transform_indices = @transform_7, window_bounds = array<i64: 1, 64>}, {transform_indices = @transform_8, window_bounds = array<i64: 8, 128>}]} {
    %c16_i32 = arith.constant 16 : i32
    %0 = arith.muli %arg0, %c16_i32 : i32
    %c0 = arith.constant 0 : index
    %c0_0 = arith.constant 0 : index
    %1 = vector.load %arg8[%c0, %c0_0] : memref<64x2xf32, #tpu.memory_space<vmem>>, vector<64x1xf32>
    %c0_1 = arith.constant 0 : index
    %c1 = arith.constant 1 : index
    %2 = vector.load %arg8[%c0_1, %c1] : memref<64x2xf32, #tpu.memory_space<vmem>>, vector<64x1xf32>
    %c0_2 = arith.constant 0 : index
    %c0_3 = arith.constant 0 : index
    %3 = vector.load %arg9[%c0_2, %c0_3] : memref<1x64xf32, #tpu.memory_space<vmem>>, vector<1x64xf32>
    %c0_4 = arith.constant 0 : index
    %4 = memref.load %arg4[%c0_4] : memref<1xf32, #tpu.memory_space<smem>>
    %cst = arith.constant 0.000000e+00 : f32
    %5 = vector.broadcast %cst : f32 to vector<1x128xf32>
    %c0_i32 = arith.constant 0 : i32
    %c2_i32 = arith.constant 2 : i32
    %6 = arith.addi %c0_i32, %c2_i32 : i32
    %c1_i32 = arith.constant 1 : i32
    %7 = scf.for %arg11 = %c0_i32 to %6 step %c1_i32 iter_args(%arg12 = %5) -> (vector<1x128xf32>)  : i32 {
      %c8_i32 = arith.constant 8 : i32
      %11 = arith.muli %arg11, %c8_i32 : i32
      %12 = tpu.assume_multiple %11, 8 : i32
      %13 = arith.index_cast %12 : i32 to index
      %c0_8 = arith.constant 0 : index
      %14 = vector.load %arg5[%13, %c0_8] : memref<16x128xf32, #tpu.memory_space<vmem>>, vector<8x128xf32>
      %15 = arith.index_cast %12 : i32 to index
      %c0_9 = arith.constant 0 : index
      %16 = vector.load %arg6[%15, %c0_9] : memref<16x128xf32, #tpu.memory_space<vmem>>, vector<8x128xf32>
      %17 = arith.addi %0, %12 : i32
      %c0_i32_10 = arith.constant 0 : i32
      %18 = arith.addi %17, %c0_i32_10 : i32
      %19 = vector.extract_strided_slice %14 {offsets = [0, 0], sizes = [1, 128], strides = [1, 1]} : vector<8x128xf32> to vector<1x128xf32>
      %20 = vector.extract_strided_slice %16 {offsets = [0, 0], sizes = [1, 128], strides = [1, 1]} : vector<8x128xf32> to vector<1x128xf32>
      %21 = arith.index_cast %18 : i32 to index
      %22 = memref.load %arg2[%21] : memref<16xf32, #tpu.memory_space<smem>>
      %23 = vector.broadcast %22 : f32 to vector<1x128xf32>
      %24 = arith.mulf %23, %19 : vector<1x128xf32>
      %25 = arith.index_cast %18 : i32 to index
      %26 = memref.load %arg3[%25] : memref<16xf32, #tpu.memory_space<smem>>
      %27 = vector.broadcast %26 : f32 to vector<1x128xf32>
      %28 = arith.mulf %27, %20 : vector<1x128xf32>
      %29 = arith.addf %24, %28 : vector<1x128xf32>
      %c0_11 = arith.constant 0 : index
      %30 = arith.index_cast %arg11 : i32 to index
      %c0_12 = arith.constant 0 : index
      %c0_13 = arith.constant 0 : index
      %31 = vector.load %arg7[%c0_11, %30, %c0_12, %c0_13] : memref<1x2x64x8xf32, #tpu.memory_space<vmem>>, vector<1x1x64x1xf32>
      %32 = vector.shape_cast %31 : vector<1x1x64x1xf32> to vector<64x1xf32>
      %33 = vector.broadcast %19 : vector<1x128xf32> to vector<64x128xf32>
      %34 = vector.broadcast %1 : vector<64x1xf32> to vector<64x128xf32>
      %35 = arith.mulf %33, %34 : vector<64x128xf32>
      %36 = vector.broadcast %29 : vector<1x128xf32> to vector<64x128xf32>
      %37 = vector.broadcast %2 : vector<64x1xf32> to vector<64x128xf32>
      %38 = arith.mulf %36, %37 : vector<64x128xf32>
      %39 = arith.addf %35, %38 : vector<64x128xf32>
      %40 = vector.broadcast %32 : vector<64x1xf32> to vector<64x128xf32>
      %41 = arith.addf %39, %40 : vector<64x128xf32>
      %cst_14 = arith.constant 0.000000e+00 : f32
      %42 = vector.broadcast %cst_14 : f32 to vector<64x128xf32>
      %43 = arith.maximumf %41, %42 : vector<64x128xf32>
      %cst_15 = arith.constant dense<0.000000e+00> : vector<1x128xf32>
      %44 = tpu.matmul %3, %43, %cst_15 {dimension_numbers = #tpu.dot_dimension_numbers<[1], [0], [0], [1], [0, 0, 1, 1], [], []>} : vector<1x64xf32>, vector<64x128xf32>, vector<1x128xf32> -> vector<1x128xf32>
      %45 = vector.broadcast %4 : f32 to vector<1x128xf32>
      %46 = arith.addf %44, %45 : vector<1x128xf32>
      %47 = arith.subf %20, %46 : vector<1x128xf32>
      %48 = arith.mulf %47, %47 : vector<1x128xf32>
      %c10_i32 = arith.constant 10 : i32
      %49 = arith.cmpi slt, %18, %c10_i32 : i32
      %50 = arith.extui %49 : i1 to i32
      %51 = arith.sitofp %50 : i32 to f32
      %52 = vector.broadcast %51 : f32 to vector<1x128xf32>
      %53 = arith.mulf %48, %52 : vector<1x128xf32>
      %54 = arith.addf %arg12, %53 : vector<1x128xf32>
      %55 = arith.addi %0, %12 : i32
      %c1_i32_16 = arith.constant 1 : i32
      %56 = arith.addi %55, %c1_i32_16 : i32
      %57 = vector.extract_strided_slice %14 {offsets = [1, 0], sizes = [1, 128], strides = [1, 1]} : vector<8x128xf32> to vector<1x128xf32>
      %58 = vector.extract_strided_slice %16 {offsets = [1, 0], sizes = [1, 128], strides = [1, 1]} : vector<8x128xf32> to vector<1x128xf32>
      %59 = arith.index_cast %56 : i32 to index
      %60 = memref.load %arg2[%59] : memref<16xf32, #tpu.memory_space<smem>>
      %61 = vector.broadcast %60 : f32 to vector<1x128xf32>
      %62 = arith.mulf %61, %57 : vector<1x128xf32>
      %63 = arith.index_cast %56 : i32 to index
      %64 = memref.load %arg3[%63] : memref<16xf32, #tpu.memory_space<smem>>
      %65 = vector.broadcast %64 : f32 to vector<1x128xf32>
      %66 = arith.mulf %65, %58 : vector<1x128xf32>
      %67 = arith.addf %62, %66 : vector<1x128xf32>
      %c0_17 = arith.constant 0 : index
      %68 = arith.index_cast %arg11 : i32 to index
      %c0_18 = arith.constant 0 : index
      %c1_19 = arith.constant 1 : index
      %69 = vector.load %arg7[%c0_17, %68, %c0_18, %c1_19] : memref<1x2x64x8xf32, #tpu.memory_space<vmem>>, vector<1x1x64x1xf32>
      %70 = vector.shape_cast %69 : vector<1x1x64x1xf32> to vector<64x1xf32>
      %71 = vector.broadcast %57 : vector<1x128xf32> to vector<64x128xf32>
      %72 = vector.broadcast %1 : vector<64x1xf32> to vector<64x128xf32>
      %73 = arith.mulf %71, %72 : vector<64x128xf32>
      %74 = vector.broadcast %67 : vector<1x128xf32> to vector<64x128xf32>
      %75 = vector.broadcast %2 : vector<64x1xf32> to vector<64x128xf32>
      %76 = arith.mulf %74, %75 : vector<64x128xf32>
      %77 = arith.addf %73, %76 : vector<64x128xf32>
      %78 = vector.broadcast %70 : vector<64x1xf32> to vector<64x128xf32>
      %79 = arith.addf %77, %78 : vector<64x128xf32>
      %cst_20 = arith.constant 0.000000e+00 : f32
      %80 = vector.broadcast %cst_20 : f32 to vector<64x128xf32>
      %81 = arith.maximumf %79, %80 : vector<64x128xf32>
      %cst_21 = arith.constant dense<0.000000e+00> : vector<1x128xf32>
      %82 = tpu.matmul %3, %81, %cst_21 {dimension_numbers = #tpu.dot_dimension_numbers<[1], [0], [0], [1], [0, 0, 1, 1], [], []>} : vector<1x64xf32>, vector<64x128xf32>, vector<1x128xf32> -> vector<1x128xf32>
      %83 = vector.broadcast %4 : f32 to vector<1x128xf32>
      %84 = arith.addf %82, %83 : vector<1x128xf32>
      %85 = arith.subf %58, %84 : vector<1x128xf32>
      %86 = arith.mulf %85, %85 : vector<1x128xf32>
      %c10_i32_22 = arith.constant 10 : i32
      %87 = arith.cmpi slt, %56, %c10_i32_22 : i32
      %88 = arith.extui %87 : i1 to i32
      %89 = arith.sitofp %88 : i32 to f32
      %90 = vector.broadcast %89 : f32 to vector<1x128xf32>
      %91 = arith.mulf %86, %90 : vector<1x128xf32>
      %92 = arith.addf %54, %91 : vector<1x128xf32>
      %93 = arith.addi %0, %12 : i32
      %c2_i32_23 = arith.constant 2 : i32
      %94 = arith.addi %93, %c2_i32_23 : i32
      %95 = vector.extract_strided_slice %14 {offsets = [2, 0], sizes = [1, 128], strides = [1, 1]} : vector<8x128xf32> to vector<1x128xf32>
      %96 = vector.extract_strided_slice %16 {offsets = [2, 0], sizes = [1, 128], strides = [1, 1]} : vector<8x128xf32> to vector<1x128xf32>
      %97 = arith.index_cast %94 : i32 to index
      %98 = memref.load %arg2[%97] : memref<16xf32, #tpu.memory_space<smem>>
      %99 = vector.broadcast %98 : f32 to vector<1x128xf32>
      %100 = arith.mulf %99, %95 : vector<1x128xf32>
      %101 = arith.index_cast %94 : i32 to index
      %102 = memref.load %arg3[%101] : memref<16xf32, #tpu.memory_space<smem>>
      %103 = vector.broadcast %102 : f32 to vector<1x128xf32>
      %104 = arith.mulf %103, %96 : vector<1x128xf32>
      %105 = arith.addf %100, %104 : vector<1x128xf32>
      %c0_24 = arith.constant 0 : index
      %106 = arith.index_cast %arg11 : i32 to index
      %c0_25 = arith.constant 0 : index
      %c2 = arith.constant 2 : index
      %107 = vector.load %arg7[%c0_24, %106, %c0_25, %c2] : memref<1x2x64x8xf32, #tpu.memory_space<vmem>>, vector<1x1x64x1xf32>
      %108 = vector.shape_cast %107 : vector<1x1x64x1xf32> to vector<64x1xf32>
      %109 = vector.broadcast %95 : vector<1x128xf32> to vector<64x128xf32>
      %110 = vector.broadcast %1 : vector<64x1xf32> to vector<64x128xf32>
      %111 = arith.mulf %109, %110 : vector<64x128xf32>
      %112 = vector.broadcast %105 : vector<1x128xf32> to vector<64x128xf32>
      %113 = vector.broadcast %2 : vector<64x1xf32> to vector<64x128xf32>
      %114 = arith.mulf %112, %113 : vector<64x128xf32>
      %115 = arith.addf %111, %114 : vector<64x128xf32>
      %116 = vector.broadcast %108 : vector<64x1xf32> to vector<64x128xf32>
      %117 = arith.addf %115, %116 : vector<64x128xf32>
      %cst_26 = arith.constant 0.000000e+00 : f32
      %118 = vector.broadcast %cst_26 : f32 to vector<64x128xf32>
      %119 = arith.maximumf %117, %118 : vector<64x128xf32>
      %cst_27 = arith.constant dense<0.000000e+00> : vector<1x128xf32>
      %120 = tpu.matmul %3, %119, %cst_27 {dimension_numbers = #tpu.dot_dimension_numbers<[1], [0], [0], [1], [0, 0, 1, 1], [], []>} : vector<1x64xf32>, vector<64x128xf32>, vector<1x128xf32> -> vector<1x128xf32>
      %121 = vector.broadcast %4 : f32 to vector<1x128xf32>
      %122 = arith.addf %120, %121 : vector<1x128xf32>
      %123 = arith.subf %96, %122 : vector<1x128xf32>
      %124 = arith.mulf %123, %123 : vector<1x128xf32>
      %c10_i32_28 = arith.constant 10 : i32
      %125 = arith.cmpi slt, %94, %c10_i32_28 : i32
      %126 = arith.extui %125 : i1 to i32
      %127 = arith.sitofp %126 : i32 to f32
      %128 = vector.broadcast %127 : f32 to vector<1x128xf32>
      %129 = arith.mulf %124, %128 : vector<1x128xf32>
      %130 = arith.addf %92, %129 : vector<1x128xf32>
      %131 = arith.addi %0, %12 : i32
      %c3_i32 = arith.constant 3 : i32
      %132 = arith.addi %131, %c3_i32 : i32
      %133 = vector.extract_strided_slice %14 {offsets = [3, 0], sizes = [1, 128], strides = [1, 1]} : vector<8x128xf32> to vector<1x128xf32>
      %134 = vector.extract_strided_slice %16 {offsets = [3, 0], sizes = [1, 128], strides = [1, 1]} : vector<8x128xf32> to vector<1x128xf32>
      %135 = arith.index_cast %132 : i32 to index
      %136 = memref.load %arg2[%135] : memref<16xf32, #tpu.memory_space<smem>>
      %137 = vector.broadcast %136 : f32 to vector<1x128xf32>
      %138 = arith.mulf %137, %133 : vector<1x128xf32>
      %139 = arith.index_cast %132 : i32 to index
      %140 = memref.load %arg3[%139] : memref<16xf32, #tpu.memory_space<smem>>
      %141 = vector.broadcast %140 : f32 to vector<1x128xf32>
      %142 = arith.mulf %141, %134 : vector<1x128xf32>
      %143 = arith.addf %138, %142 : vector<1x128xf32>
      %c0_29 = arith.constant 0 : index
      %144 = arith.index_cast %arg11 : i32 to index
      %c0_30 = arith.constant 0 : index
      %c3 = arith.constant 3 : index
      %145 = vector.load %arg7[%c0_29, %144, %c0_30, %c3] : memref<1x2x64x8xf32, #tpu.memory_space<vmem>>, vector<1x1x64x1xf32>
      %146 = vector.shape_cast %145 : vector<1x1x64x1xf32> to vector<64x1xf32>
      %147 = vector.broadcast %133 : vector<1x128xf32> to vector<64x128xf32>
      %148 = vector.broadcast %1 : vector<64x1xf32> to vector<64x128xf32>
      %149 = arith.mulf %147, %148 : vector<64x128xf32>
      %150 = vector.broadcast %143 : vector<1x128xf32> to vector<64x128xf32>
      %151 = vector.broadcast %2 : vector<64x1xf32> to vector<64x128xf32>
      %152 = arith.mulf %150, %151 : vector<64x128xf32>
      %153 = arith.addf %149, %152 : vector<64x128xf32>
      %154 = vector.broadcast %146 : vector<64x1xf32> to vector<64x128xf32>
      %155 = arith.addf %153, %154 : vector<64x128xf32>
      %cst_31 = arith.constant 0.000000e+00 : f32
      %156 = vector.broadcast %cst_31 : f32 to vector<64x128xf32>
      %157 = arith.maximumf %155, %156 : vector<64x128xf32>
      %cst_32 = arith.constant dense<0.000000e+00> : vector<1x128xf32>
      %158 = tpu.matmul %3, %157, %cst_32 {dimension_numbers = #tpu.dot_dimension_numbers<[1], [0], [0], [1], [0, 0, 1, 1], [], []>} : vector<1x64xf32>, vector<64x128xf32>, vector<1x128xf32> -> vector<1x128xf32>
      %159 = vector.broadcast %4 : f32 to vector<1x128xf32>
      %160 = arith.addf %158, %159 : vector<1x128xf32>
      %161 = arith.subf %134, %160 : vector<1x128xf32>
      %162 = arith.mulf %161, %161 : vector<1x128xf32>
      %c10_i32_33 = arith.constant 10 : i32
      %163 = arith.cmpi slt, %132, %c10_i32_33 : i32
      %164 = arith.extui %163 : i1 to i32
      %165 = arith.sitofp %164 : i32 to f32
      %166 = vector.broadcast %165 : f32 to vector<1x128xf32>
      %167 = arith.mulf %162, %166 : vector<1x128xf32>
      %168 = arith.addf %130, %167 : vector<1x128xf32>
      %169 = arith.addi %0, %12 : i32
      %c4_i32 = arith.constant 4 : i32
      %170 = arith.addi %169, %c4_i32 : i32
      %171 = vector.extract_strided_slice %14 {offsets = [4, 0], sizes = [1, 128], strides = [1, 1]} : vector<8x128xf32> to vector<1x128xf32>
      %172 = vector.extract_strided_slice %16 {offsets = [4, 0], sizes = [1, 128], strides = [1, 1]} : vector<8x128xf32> to vector<1x128xf32>
      %173 = arith.index_cast %170 : i32 to index
      %174 = memref.load %arg2[%173] : memref<16xf32, #tpu.memory_space<smem>>
      %175 = vector.broadcast %174 : f32 to vector<1x128xf32>
      %176 = arith.mulf %175, %171 : vector<1x128xf32>
      %177 = arith.index_cast %170 : i32 to index
      %178 = memref.load %arg3[%177] : memref<16xf32, #tpu.memory_space<smem>>
      %179 = vector.broadcast %178 : f32 to vector<1x128xf32>
      %180 = arith.mulf %179, %172 : vector<1x128xf32>
      %181 = arith.addf %176, %180 : vector<1x128xf32>
      %c0_34 = arith.constant 0 : index
      %182 = arith.index_cast %arg11 : i32 to index
      %c0_35 = arith.constant 0 : index
      %c4 = arith.constant 4 : index
      %183 = vector.load %arg7[%c0_34, %182, %c0_35, %c4] : memref<1x2x64x8xf32, #tpu.memory_space<vmem>>, vector<1x1x64x1xf32>
      %184 = vector.shape_cast %183 : vector<1x1x64x1xf32> to vector<64x1xf32>
      %185 = vector.broadcast %171 : vector<1x128xf32> to vector<64x128xf32>
      %186 = vector.broadcast %1 : vector<64x1xf32> to vector<64x128xf32>
      %187 = arith.mulf %185, %186 : vector<64x128xf32>
      %188 = vector.broadcast %181 : vector<1x128xf32> to vector<64x128xf32>
      %189 = vector.broadcast %2 : vector<64x1xf32> to vector<64x128xf32>
      %190 = arith.mulf %188, %189 : vector<64x128xf32>
      %191 = arith.addf %187, %190 : vector<64x128xf32>
      %192 = vector.broadcast %184 : vector<64x1xf32> to vector<64x128xf32>
      %193 = arith.addf %191, %192 : vector<64x128xf32>
      %cst_36 = arith.constant 0.000000e+00 : f32
      %194 = vector.broadcast %cst_36 : f32 to vector<64x128xf32>
      %195 = arith.maximumf %193, %194 : vector<64x128xf32>
      %cst_37 = arith.constant dense<0.000000e+00> : vector<1x128xf32>
      %196 = tpu.matmul %3, %195, %cst_37 {dimension_numbers = #tpu.dot_dimension_numbers<[1], [0], [0], [1], [0, 0, 1, 1], [], []>} : vector<1x64xf32>, vector<64x128xf32>, vector<1x128xf32> -> vector<1x128xf32>
      %197 = vector.broadcast %4 : f32 to vector<1x128xf32>
      %198 = arith.addf %196, %197 : vector<1x128xf32>
      %199 = arith.subf %172, %198 : vector<1x128xf32>
      %200 = arith.mulf %199, %199 : vector<1x128xf32>
      %c10_i32_38 = arith.constant 10 : i32
      %201 = arith.cmpi slt, %170, %c10_i32_38 : i32
      %202 = arith.extui %201 : i1 to i32
      %203 = arith.sitofp %202 : i32 to f32
      %204 = vector.broadcast %203 : f32 to vector<1x128xf32>
      %205 = arith.mulf %200, %204 : vector<1x128xf32>
      %206 = arith.addf %168, %205 : vector<1x128xf32>
      %207 = arith.addi %0, %12 : i32
      %c5_i32 = arith.constant 5 : i32
      %208 = arith.addi %207, %c5_i32 : i32
      %209 = vector.extract_strided_slice %14 {offsets = [5, 0], sizes = [1, 128], strides = [1, 1]} : vector<8x128xf32> to vector<1x128xf32>
      %210 = vector.extract_strided_slice %16 {offsets = [5, 0], sizes = [1, 128], strides = [1, 1]} : vector<8x128xf32> to vector<1x128xf32>
      %211 = arith.index_cast %208 : i32 to index
      %212 = memref.load %arg2[%211] : memref<16xf32, #tpu.memory_space<smem>>
      %213 = vector.broadcast %212 : f32 to vector<1x128xf32>
      %214 = arith.mulf %213, %209 : vector<1x128xf32>
      %215 = arith.index_cast %208 : i32 to index
      %216 = memref.load %arg3[%215] : memref<16xf32, #tpu.memory_space<smem>>
      %217 = vector.broadcast %216 : f32 to vector<1x128xf32>
      %218 = arith.mulf %217, %210 : vector<1x128xf32>
      %219 = arith.addf %214, %218 : vector<1x128xf32>
      %c0_39 = arith.constant 0 : index
      %220 = arith.index_cast %arg11 : i32 to index
      %c0_40 = arith.constant 0 : index
      %c5 = arith.constant 5 : index
      %221 = vector.load %arg7[%c0_39, %220, %c0_40, %c5] : memref<1x2x64x8xf32, #tpu.memory_space<vmem>>, vector<1x1x64x1xf32>
      %222 = vector.shape_cast %221 : vector<1x1x64x1xf32> to vector<64x1xf32>
      %223 = vector.broadcast %209 : vector<1x128xf32> to vector<64x128xf32>
      %224 = vector.broadcast %1 : vector<64x1xf32> to vector<64x128xf32>
      %225 = arith.mulf %223, %224 : vector<64x128xf32>
      %226 = vector.broadcast %219 : vector<1x128xf32> to vector<64x128xf32>
      %227 = vector.broadcast %2 : vector<64x1xf32> to vector<64x128xf32>
      %228 = arith.mulf %226, %227 : vector<64x128xf32>
      %229 = arith.addf %225, %228 : vector<64x128xf32>
      %230 = vector.broadcast %222 : vector<64x1xf32> to vector<64x128xf32>
      %231 = arith.addf %229, %230 : vector<64x128xf32>
      %cst_41 = arith.constant 0.000000e+00 : f32
      %232 = vector.broadcast %cst_41 : f32 to vector<64x128xf32>
      %233 = arith.maximumf %231, %232 : vector<64x128xf32>
      %cst_42 = arith.constant dense<0.000000e+00> : vector<1x128xf32>
      %234 = tpu.matmul %3, %233, %cst_42 {dimension_numbers = #tpu.dot_dimension_numbers<[1], [0], [0], [1], [0, 0, 1, 1], [], []>} : vector<1x64xf32>, vector<64x128xf32>, vector<1x128xf32> -> vector<1x128xf32>
      %235 = vector.broadcast %4 : f32 to vector<1x128xf32>
      %236 = arith.addf %234, %235 : vector<1x128xf32>
      %237 = arith.subf %210, %236 : vector<1x128xf32>
      %238 = arith.mulf %237, %237 : vector<1x128xf32>
      %c10_i32_43 = arith.constant 10 : i32
      %239 = arith.cmpi slt, %208, %c10_i32_43 : i32
      %240 = arith.extui %239 : i1 to i32
      %241 = arith.sitofp %240 : i32 to f32
      %242 = vector.broadcast %241 : f32 to vector<1x128xf32>
      %243 = arith.mulf %238, %242 : vector<1x128xf32>
      %244 = arith.addf %206, %243 : vector<1x128xf32>
      %245 = arith.addi %0, %12 : i32
      %c6_i32 = arith.constant 6 : i32
      %246 = arith.addi %245, %c6_i32 : i32
      %247 = vector.extract_strided_slice %14 {offsets = [6, 0], sizes = [1, 128], strides = [1, 1]} : vector<8x128xf32> to vector<1x128xf32>
      %248 = vector.extract_strided_slice %16 {offsets = [6, 0], sizes = [1, 128], strides = [1, 1]} : vector<8x128xf32> to vector<1x128xf32>
      %249 = arith.index_cast %246 : i32 to index
      %250 = memref.load %arg2[%249] : memref<16xf32, #tpu.memory_space<smem>>
      %251 = vector.broadcast %250 : f32 to vector<1x128xf32>
      %252 = arith.mulf %251, %247 : vector<1x128xf32>
      %253 = arith.index_cast %246 : i32 to index
      %254 = memref.load %arg3[%253] : memref<16xf32, #tpu.memory_space<smem>>
      %255 = vector.broadcast %254 : f32 to vector<1x128xf32>
      %256 = arith.mulf %255, %248 : vector<1x128xf32>
      %257 = arith.addf %252, %256 : vector<1x128xf32>
      %c0_44 = arith.constant 0 : index
      %258 = arith.index_cast %arg11 : i32 to index
      %c0_45 = arith.constant 0 : index
      %c6 = arith.constant 6 : index
      %259 = vector.load %arg7[%c0_44, %258, %c0_45, %c6] : memref<1x2x64x8xf32, #tpu.memory_space<vmem>>, vector<1x1x64x1xf32>
      %260 = vector.shape_cast %259 : vector<1x1x64x1xf32> to vector<64x1xf32>
      %261 = vector.broadcast %247 : vector<1x128xf32> to vector<64x128xf32>
      %262 = vector.broadcast %1 : vector<64x1xf32> to vector<64x128xf32>
      %263 = arith.mulf %261, %262 : vector<64x128xf32>
      %264 = vector.broadcast %257 : vector<1x128xf32> to vector<64x128xf32>
      %265 = vector.broadcast %2 : vector<64x1xf32> to vector<64x128xf32>
      %266 = arith.mulf %264, %265 : vector<64x128xf32>
      %267 = arith.addf %263, %266 : vector<64x128xf32>
      %268 = vector.broadcast %260 : vector<64x1xf32> to vector<64x128xf32>
      %269 = arith.addf %267, %268 : vector<64x128xf32>
      %cst_46 = arith.constant 0.000000e+00 : f32
      %270 = vector.broadcast %cst_46 : f32 to vector<64x128xf32>
      %271 = arith.maximumf %269, %270 : vector<64x128xf32>
      %cst_47 = arith.constant dense<0.000000e+00> : vector<1x128xf32>
      %272 = tpu.matmul %3, %271, %cst_47 {dimension_numbers = #tpu.dot_dimension_numbers<[1], [0], [0], [1], [0, 0, 1, 1], [], []>} : vector<1x64xf32>, vector<64x128xf32>, vector<1x128xf32> -> vector<1x128xf32>
      %273 = vector.broadcast %4 : f32 to vector<1x128xf32>
      %274 = arith.addf %272, %273 : vector<1x128xf32>
      %275 = arith.subf %248, %274 : vector<1x128xf32>
      %276 = arith.mulf %275, %275 : vector<1x128xf32>
      %c10_i32_48 = arith.constant 10 : i32
      %277 = arith.cmpi slt, %246, %c10_i32_48 : i32
      %278 = arith.extui %277 : i1 to i32
      %279 = arith.sitofp %278 : i32 to f32
      %280 = vector.broadcast %279 : f32 to vector<1x128xf32>
      %281 = arith.mulf %276, %280 : vector<1x128xf32>
      %282 = arith.addf %244, %281 : vector<1x128xf32>
      %283 = arith.addi %0, %12 : i32
      %c7_i32 = arith.constant 7 : i32
      %284 = arith.addi %283, %c7_i32 : i32
      %285 = vector.extract_strided_slice %14 {offsets = [7, 0], sizes = [1, 128], strides = [1, 1]} : vector<8x128xf32> to vector<1x128xf32>
      %286 = vector.extract_strided_slice %16 {offsets = [7, 0], sizes = [1, 128], strides = [1, 1]} : vector<8x128xf32> to vector<1x128xf32>
      %287 = arith.index_cast %284 : i32 to index
      %288 = memref.load %arg2[%287] : memref<16xf32, #tpu.memory_space<smem>>
      %289 = vector.broadcast %288 : f32 to vector<1x128xf32>
      %290 = arith.mulf %289, %285 : vector<1x128xf32>
      %291 = arith.index_cast %284 : i32 to index
      %292 = memref.load %arg3[%291] : memref<16xf32, #tpu.memory_space<smem>>
      %293 = vector.broadcast %292 : f32 to vector<1x128xf32>
      %294 = arith.mulf %293, %286 : vector<1x128xf32>
      %295 = arith.addf %290, %294 : vector<1x128xf32>
      %c0_49 = arith.constant 0 : index
      %296 = arith.index_cast %arg11 : i32 to index
      %c0_50 = arith.constant 0 : index
      %c7 = arith.constant 7 : index
      %297 = vector.load %arg7[%c0_49, %296, %c0_50, %c7] : memref<1x2x64x8xf32, #tpu.memory_space<vmem>>, vector<1x1x64x1xf32>
      %298 = vector.shape_cast %297 : vector<1x1x64x1xf32> to vector<64x1xf32>
      %299 = vector.broadcast %285 : vector<1x128xf32> to vector<64x128xf32>
      %300 = vector.broadcast %1 : vector<64x1xf32> to vector<64x128xf32>
      %301 = arith.mulf %299, %300 : vector<64x128xf32>
      %302 = vector.broadcast %295 : vector<1x128xf32> to vector<64x128xf32>
      %303 = vector.broadcast %2 : vector<64x1xf32> to vector<64x128xf32>
      %304 = arith.mulf %302, %303 : vector<64x128xf32>
      %305 = arith.addf %301, %304 : vector<64x128xf32>
      %306 = vector.broadcast %298 : vector<64x1xf32> to vector<64x128xf32>
      %307 = arith.addf %305, %306 : vector<64x128xf32>
      %cst_51 = arith.constant 0.000000e+00 : f32
      %308 = vector.broadcast %cst_51 : f32 to vector<64x128xf32>
      %309 = arith.maximumf %307, %308 : vector<64x128xf32>
      %cst_52 = arith.constant dense<0.000000e+00> : vector<1x128xf32>
      %310 = tpu.matmul %3, %309, %cst_52 {dimension_numbers = #tpu.dot_dimension_numbers<[1], [0], [0], [1], [0, 0, 1, 1], [], []>} : vector<1x64xf32>, vector<64x128xf32>, vector<1x128xf32> -> vector<1x128xf32>
      %311 = vector.broadcast %4 : f32 to vector<1x128xf32>
      %312 = arith.addf %310, %311 : vector<1x128xf32>
      %313 = arith.subf %286, %312 : vector<1x128xf32>
      %314 = arith.mulf %313, %313 : vector<1x128xf32>
      %c10_i32_53 = arith.constant 10 : i32
      %315 = arith.cmpi slt, %284, %c10_i32_53 : i32
      %316 = arith.extui %315 : i1 to i32
      %317 = arith.sitofp %316 : i32 to f32
      %318 = vector.broadcast %317 : f32 to vector<1x128xf32>
      %319 = arith.mulf %314, %318 : vector<1x128xf32>
      %320 = arith.addf %282, %319 : vector<1x128xf32>
      scf.yield %320 : vector<1x128xf32>
    }
    %c2_i32_5 = arith.constant 2 : i32
    %8 = vector.shape_cast %7 : vector<1x128xf32> to vector<1x128xf32>
    %9 = vector.broadcast %8 : vector<1x128xf32> to vector<8x128xf32>
    %c0_6 = arith.constant 0 : index
    %c0_7 = arith.constant 0 : index
    %10 = vector.load %arg10[%c0_6, %c0_7] : memref<8x128xf32, #tpu.memory_space<vmem>>, vector<8x128xf32>
    tpu.vector_store %arg10[%c0_6, %c0_7], %9 {strides = array<i32>} : memref<8x128xf32, #tpu.memory_space<vmem>>, vector<8x128xf32>,
    return
  }
  func.func @transform_0(%arg0: i32, %arg1: i32) -> i32 {
    %c0_i32 = arith.constant 0 : i32
    %c0_i32_0 = arith.constant 0 : i32
    return %c0_i32 : i32
  }
  func.func @transform_1(%arg0: i32, %arg1: i32) -> i32 {
    %c0_i32 = arith.constant 0 : i32
    %c0_i32_0 = arith.constant 0 : i32
    return %c0_i32 : i32
  }
  func.func @transform_2(%arg0: i32, %arg1: i32) -> i32 {
    %c0_i32 = arith.constant 0 : i32
    %c0_i32_0 = arith.constant 0 : i32
    return %c0_i32 : i32
  }
  func.func @transform_3(%arg0: i32, %arg1: i32) -> (i32, i32) {
    %c0_i32 = arith.constant 0 : i32
    return %arg0, %arg1 : i32, i32
  }
  func.func @transform_4(%arg0: i32, %arg1: i32) -> (i32, i32) {
    %c0_i32 = arith.constant 0 : i32
    return %arg0, %arg1 : i32, i32
  }
  func.func @transform_5(%arg0: i32, %arg1: i32) -> (i32, i32, i32, i32) {
    %c0_i32 = arith.constant 0 : i32
    %c0_i32_0 = arith.constant 0 : i32
    %c0_i32_1 = arith.constant 0 : i32
    %c0_i32_2 = arith.constant 0 : i32
    return %arg0, %c0_i32, %c0_i32_0, %c0_i32_1 : i32, i32, i32, i32
  }
  func.func @transform_6(%arg0: i32, %arg1: i32) -> (i32, i32) {
    %c0_i32 = arith.constant 0 : i32
    %c0_i32_0 = arith.constant 0 : i32
    %c0_i32_1 = arith.constant 0 : i32
    return %c0_i32, %c0_i32_0 : i32, i32
  }
  func.func @transform_7(%arg0: i32, %arg1: i32) -> (i32, i32) {
    %c0_i32 = arith.constant 0 : i32
    %c0_i32_0 = arith.constant 0 : i32
    %c0_i32_1 = arith.constant 0 : i32
    return %c0_i32, %c0_i32_0 : i32, i32
  }
  func.func @transform_8(%arg0: i32, %arg1: i32) -> (i32, i32) {
    %c0_i32 = arith.constant 0 : i32
    return %arg0, %arg1 : i32, i32
  }
}

</mosaic_0001>

<llo_original>
// kernel: tpu_custom_call.1
$region0: #{tpu_custom_call.1}
  #allocation0 [shape = 'u32[]', space=smem, size = 0x4, offset = 0x4, fixed_abs, tag = 'smem constant byte address 0x4 - core index']
  #allocation1 [shape = 'u32[144,128]{1,0:T(1,128)}', space=vmem, size = 0x12000, scoped, tag = 'internal scratch']
  #allocation2 [shape = 'f32[1]{0:T(128)S(6)}', space=smem, size = 0x200, scoped, tag = 'scoped memory for tpu_custom_call.1']
  %s0 = inlined_call_operand.vmem [shape: f32[16], index: 0, kind: input, shape index: {}]
  %s1 = inlined_call_operand.vmem [shape: f32[16], index: 1, kind: input, shape index: {}]
  %s2 = inlined_call_operand.<no memory space> [shape: f32[1], index: 2, kind: input, shape index: {}]
  %s3 = inlined_call_operand.vmem [shape: f32[16,128], index: 3, kind: input, shape index: {}]
  %s4 = inlined_call_operand.vmem [shape: f32[16,128], index: 4, kind: input, shape index: {}]
  %s5 = inlined_call_operand.vmem [shape: f32[1,2,64,8], index: 5, kind: input, shape index: {}]
  %s6 = inlined_call_operand.vmem [shape: f32[64,2], index: 6, kind: input, shape index: {}]
  %s7 = inlined_call_operand.vmem [shape: f32[1,64], index: 7, kind: input, shape index: {}]
  %s8 = inlined_call_operand.hbm [shape: f32[8,128], index: 8, kind: output, shape index: {}]
  %s9 = sld [smem:[#allocation0]]
  $region57: #{tpu_custom_call.1} parent=0
    _
  %s11 = ssub.s32 1, %s9
  %s12 = scalar_select 0, %s11, %s9
  %13 = sst [smem:[#allocation2]] %s2
  $region1: #{tpu_custom_call.1} parent=0
    #allocation3 [shape = 'u8[512]{0}', space=smem, size = 0x200, scoped, tag = 'input window, operand 0, single buffered']
    #allocation4 [shape = 's32[1]{0}', space=sflag, size = 0x4, scoped, tag = 'scoped memory for tpu_custom_call.1']
    #allocation5 [shape = 's32[1]{0}', space=sflag, size = 0x4, scoped, tag = 'scoped memory for tpu_custom_call.1']
    #allocation6 [shape = 'u8[512]{0}', space=smem, size = 0x200, scoped, tag = 'input window, operand 1, single buffered']
    #allocation7 [shape = 's32[1]{0}', space=sflag, size = 0x4, scoped, tag = 'scoped memory for tpu_custom_call.1']
    #allocation8 [shape = 'u8[4096]{0}', space=vmem, size = 0x1000, scoped, tag = 'output window, operand 0, single buffered']
    %14 = vsyncpa [#allocation5], 0
    %15 = vsyncpa [#allocation7], 0
    %16 = vsyncpa [#allocation4], 0
    // Predicated region
    $region2: #{tpu_custom_call.1} parent=1 // pred_check
      _
    $region3: #{tpu_custom_call.1} parent=1 // pred_check_branch
      %18 = sbr.rel (0) target = $region5
    $region4: #{tpu_custom_call.1} parent=1 // pred_region
      %s20 = ssub.s32 16, 16
      %21 = vsyncadd [#allocation5], %s20
      %s23 = sshll.u32 %s0, 4
      %s24 = int_to_ptr.vmem [resolvable:$true] %s23
      %26 = dma.vmem_to_smem %s24, 16, [#allocation3], [#allocation5]
    $region5: #{tpu_custom_call.1} parent=1 // pred_fallthru
      _
    // Predicated region
    $region6: #{tpu_custom_call.1} parent=1 // pred_check
      _
    $region7: #{tpu_custom_call.1} parent=1 // pred_check_branch
      %28 = sbr.rel (0) target = $region9
    $region8: #{tpu_custom_call.1} parent=1 // pred_region
      %s30 = ssub.s32 16, 16
      %31 = vsyncadd [#allocation7], %s30
      %s33 = sshll.u32 %s1, 4
      %s34 = int_to_ptr.vmem [resolvable:$true] %s33
      %36 = dma.vmem_to_smem %s34, 16, [#allocation6], [#allocation7]
    $region9: #{tpu_custom_call.1} parent=1 // pred_fallthru
      _
    // Predicated region
    $region10: #{tpu_custom_call.1} parent=1 // pred_check
      _
    $region11: #{tpu_custom_call.1} parent=1 // pred_check_branch
      %38 = sbr.rel (0) target = $region13
    $region12: #{tpu_custom_call.1} parent=1 // pred_region
      _
    $region13: #{tpu_custom_call.1} parent=1 // pred_fallthru
      _
    // Predicated region
    $region14: #{tpu_custom_call.1} parent=1 // pred_check
      _
    $region15: #{tpu_custom_call.1} parent=1 // pred_check_branch
      %40 = sbr.rel (0) target = $region17
    $region16: #{tpu_custom_call.1} parent=1 // pred_region
      _
    $region17: #{tpu_custom_call.1} parent=1 // pred_fallthru
      _
    // Predicated region
    $region18: #{tpu_custom_call.1} parent=1 // pred_check
      _
    $region19: #{tpu_custom_call.1} parent=1 // pred_check_branch
      %42 = sbr.rel (0) target = $region21
    $region20: #{tpu_custom_call.1} parent=1 // pred_region
      _
    $region21: #{tpu_custom_call.1} parent=1 // pred_fallthru
      _
    // Predicated region
    $region22: #{tpu_custom_call.1} parent=1 // pred_check
      _
    $region23: #{tpu_custom_call.1} parent=1 // pred_check_branch
      %44 = sbr.rel (0) target = $region25
    $region24: #{tpu_custom_call.1} parent=1 // pred_region
      _
    $region25: #{tpu_custom_call.1} parent=1 // pred_fallthru
      _
    // Predicated region
    $region26: #{tpu_custom_call.1} parent=1 // pred_check
      _
    $region27: #{tpu_custom_call.1} parent=1 // pred_check_branch
      %46 = sbr.rel (0) target = $region29
    $region28: #{tpu_custom_call.1} parent=1 // pred_region
      _
    $region29: #{tpu_custom_call.1} parent=1 // pred_fallthru
      _
    // Predicated region
    $region30: #{tpu_custom_call.1} parent=1 // pred_check
      _
    $region31: #{tpu_custom_call.1} parent=1 // pred_check_branch
      %48 = sbr.rel (0) target = $region33
    $region32: #{tpu_custom_call.1} parent=1 // pred_region
      _
    $region33: #{tpu_custom_call.1} parent=1 // pred_fallthru
      _
    // Predicated region
    $region34: #{tpu_custom_call.1} parent=1 // pred_check
      _
    $region35: #{tpu_custom_call.1} parent=1 // pred_check_branch
      %50 = sbr.rel (0) target = $region37
    $region36: #{tpu_custom_call.1} parent=1 // pred_region
      %51 = dma.done [#allocation5], 16
    $region37: #{tpu_custom_call.1} parent=1 // pred_fallthru
      _
    // Predicated region
    $region38: #{tpu_custom_call.1} parent=1 // pred_check
      _
    $region39: #{tpu_custom_call.1} parent=1 // pred_check_branch
      %53 = sbr.rel (0) target = $region41
    $region40: #{tpu_custom_call.1} parent=1 // pred_region
      %54 = dma.done [#allocation7], 16
    $region41: #{tpu_custom_call.1} parent=1 // pred_fallthru
      _
    %55 = sfence
    %s56 = smul.u32 0, 16
    %v57 = vld [vmem:[%s6] sm:$0xff]
    %v58 = vld [vmem:[%s6 + $0x8] sm:$0xff]
    %v59 = vld [vmem:[%s6 + $0x10] sm:$0xff]
    %v60 = vld [vmem:[%s6 + $0x18] sm:$0xff]
    %v61 = vld [vmem:[%s6 + $0x20] sm:$0xff]
    %v62 = vld [vmem:[%s6 + $0x28] sm:$0xff]
    %v63 = vld [vmem:[%s6 + $0x30] sm:$0xff]
    %v64 = vld [vmem:[%s6 + $0x38] sm:$0xff]
    %v65 = vld [vmem:[%s7] sm:$0x1]
    %s66 = sld [smem:[#allocation2]]
    loop: start=0, step=1, limit=2
    $region42: #{tpu_custom_call.1} parent=1 // loop_pre_header
      _
    $region43: #{tpu_custom_call.1} parent=1 // loop_header
      %s68 = sphi 0, %s72
      %p69 = scmp.ge.s32.totalorder %s68, 2
      %v73 = vphi 0.0, %v1543
    $region44: #{tpu_custom_call.1} parent=1 // loop_header_branch
      %71 = sbr.rel (%p69) target = $region48
    $region45: #{tpu_custom_call.1} parent=1 // loop_body
      %s74 = smul.u32 %s68, 8
      %s75 = scalar_lea.vmem %s3, %s74
      %v76 = vld [vmem:[%s75] sm:$0xff]
      %s77 = scalar_lea.vmem %s4, %s74
      %v78 = vld [vmem:[%s77] sm:$0xff]
      %s79 = sadd.s32 %s56, %s74
      %s80 = sld [smem:[#allocation3 + %s79]]
      %v81 = vstv %s80
      %v82 = vmul.f32 %v81, %v76
      %s83 = sld [smem:[#allocation6 + %s79]]
      %v84 = vstv %s83
      %v85 = vmul.f32 %v84, %v78
      %v86 = vadd.f32 %v82, %v85
      %s87 = smul.u32 %s68, 64
      %s88 = scalar_lea.vmem %s5, %s87
      %v89 = vld [vmem:[%s88] sm:$0xff]
      %v90 = vld [vmem:[%s88 + $0x8] sm:$0xff]
      %v91 = vld [vmem:[%s88 + $0x10] sm:$0xff]
      %v92 = vld [vmem:[%s88 + $0x18] sm:$0xff]
      %v93 = vld [vmem:[%s88 + $0x20] sm:$0xff]
      %v94 = vld [vmem:[%s88 + $0x28] sm:$0xff]
      %v95 = vld [vmem:[%s88 + $0x30] sm:$0xff]
      %v96 = vld [vmem:[%s88 + $0x38] sm:$0xff]
      %v97 = vlaneseq
      %v98 = vshrl.u32 %v97, 7
      %v99 = vsub.s32 0, %v98
      %v100 = vrot.slane %v76, %v99
      %102 = vset.pattern.permute.xlu0 0
      %103 = vperm.xlu0 %102, %v57
      %v104 = vpop.permute.xlu0 %103
      %107 = vset.pattern.permute.xlu0 0
      %108 = vperm.xlu0 %107, %v58
      %v109 = vpop.permute.xlu0 %108
      %112 = vset.pattern.permute.xlu0 0
      %113 = vperm.xlu0 %112, %v59
      %v114 = vpop.permute.xlu0 %113
      %117 = vset.pattern.permute.xlu0 0
      %118 = vperm.xlu0 %117, %v60
      %v119 = vpop.permute.xlu0 %118
      %122 = vset.pattern.permute.xlu0 0
      %123 = vperm.xlu0 %122, %v61
      %v124 = vpop.permute.xlu0 %123
      %127 = vset.pattern.permute.xlu0 0
      %128 = vperm.xlu0 %127, %v62
      %v129 = vpop.permute.xlu0 %128
      %132 = vset.pattern.permute.xlu0 0
      %133 = vperm.xlu0 %132, %v63
      %v134 = vpop.permute.xlu0 %133
      %137 = vset.pattern.permute.xlu0 0
      %138 = vperm.xlu0 %137, %v64
      %v139 = vpop.permute.xlu0 %138
      %v141 = vmul.f32 %v100, %v104
      %v142 = vmul.f32 %v100, %v109
      %v143 = vmul.f32 %v100, %v114
      %v144 = vmul.f32 %v100, %v119
      %v145 = vmul.f32 %v100, %v124
      %v146 = vmul.f32 %v100, %v129
      %v147 = vmul.f32 %v100, %v134
      %v148 = vmul.f32 %v100, %v139
      %v149 = vlaneseq
      %v150 = vshrl.u32 %v149, 7
      %v151 = vsub.s32 0, %v150
      %v152 = vrot.slane %v86, %v151
      %153 = vset.pattern.permute.xlu0 1
      %154 = vperm.xlu0 %153, %v57
      %v155 = vpop.permute.xlu0 %154
      %157 = vset.pattern.permute.xlu0 1
      %158 = vperm.xlu0 %157, %v58
      %v159 = vpop.permute.xlu0 %158
      %161 = vset.pattern.permute.xlu0 1
      %162 = vperm.xlu0 %161, %v59
      %v163 = vpop.permute.xlu0 %162
      %165 = vset.pattern.permute.xlu0 1
      %166 = vperm.xlu0 %165, %v60
      %v167 = vpop.permute.xlu0 %166
      %169 = vset.pattern.permute.xlu0 1
      %170 = vperm.xlu0 %169, %v61
      %v171 = vpop.permute.xlu0 %170
      %173 = vset.pattern.permute.xlu0 1
      %174 = vperm.xlu0 %173, %v62
      %v175 = vpop.permute.xlu0 %174
      %177 = vset.pattern.permute.xlu0 1
      %178 = vperm.xlu0 %177, %v63
      %v179 = vpop.permute.xlu0 %178
      %181 = vset.pattern.permute.xlu0 1
      %182 = vperm.xlu0 %181, %v64
      %v183 = vpop.permute.xlu0 %182
      %v185 = vmul.f32 %v152, %v155
      %v186 = vmul.f32 %v152, %v159
      %v187 = vmul.f32 %v152, %v163
      %v188 = vmul.f32 %v152, %v167
      %v189 = vmul.f32 %v152, %v171
      %v190 = vmul.f32 %v152, %v175
      %v191 = vmul.f32 %v152, %v179
      %v192 = vmul.f32 %v152, %v183
      %v193 = vadd.f32 %v141, %v185
      %v194 = vadd.f32 %v142, %v186
      %v195 = vadd.f32 %v143, %v187
      %v196 = vadd.f32 %v144, %v188
      %v197 = vadd.f32 %v145, %v189
      %v198 = vadd.f32 %v146, %v190
      %v199 = vadd.f32 %v147, %v191
      %v200 = vadd.f32 %v148, %v192
      %202 = vset.pattern.permute.xlu0 0
      %203 = vperm.xlu0 %202, %v89
      %v204 = vpop.permute.xlu0 %203
      %207 = vset.pattern.permute.xlu0 0
      %208 = vperm.xlu0 %207, %v90
      %v209 = vpop.permute.xlu0 %208
      %212 = vset.pattern.permute.xlu0 0
      %213 = vperm.xlu0 %212, %v91
      %v214 = vpop.permute.xlu0 %213
      %217 = vset.pattern.permute.xlu0 0
      %218 = vperm.xlu0 %217, %v92
      %v219 = vpop.permute.xlu0 %218
      %222 = vset.pattern.permute.xlu0 0
      %223 = vperm.xlu0 %222, %v93
      %v224 = vpop.permute.xlu0 %223
      %227 = vset.pattern.permute.xlu0 0
      %228 = vperm.xlu0 %227, %v94
      %v229 = vpop.permute.xlu0 %228
      %232 = vset.pattern.permute.xlu0 0
      %233 = vperm.xlu0 %232, %v95
      %v234 = vpop.permute.xlu0 %233
      %237 = vset.pattern.permute.xlu0 0
      %238 = vperm.xlu0 %237, %v96
      %v239 = vpop.permute.xlu0 %238
      %v241 = vadd.f32 %v193, %v204
      %v242 = vadd.f32 %v194, %v209
      %v243 = vadd.f32 %v195, %v214
      %v244 = vadd.f32 %v196, %v219
      %v245 = vadd.f32 %v197, %v224
      %v246 = vadd.f32 %v198, %v229
      %v247 = vadd.f32 %v199, %v234
      %v248 = vadd.f32 %v200, %v239
      %v249 = vmax.f32 %v241, 0.0
      %v250 = vmax.f32 %v242, 0.0
      %v251 = vmax.f32 %v243, 0.0
      %v252 = vmax.f32 %v244, 0.0
      %v253 = vmax.f32 %v245, 0.0
      %v254 = vmax.f32 %v246, 0.0
      %v255 = vmax.f32 %v247, 0.0
      %v256 = vmax.f32 %v248, 0.0
      %v257 = vstv %s66
      %vm258 = vcmask 523264
      %v260 = vsel %vm258, %v65, 0
      %262 = vmatprep.subr.mxu0 0.0
      %263 = vmatpush1.msra.mxu0 %v249
      %264 = vmatprep.subr.mxu0 0.0
      %265 = vmatpush1.msra.mxu0 %v250
      %266 = vmatprep.subr.mxu0 0.0
      %267 = vmatpush1.msra.mxu0 %v251
      %268 = vmatprep.subr.mxu0 0.0
      %269 = vmatpush1.msra.mxu0 %v252
      %270 = vmatprep.subr.mxu0 0.0
      %271 = vmatpush1.msra.mxu0 %v253
      %272 = vmatprep.subr.mxu0 0.0
      %273 = vmatpush1.msra.mxu0 %v254
      %274 = vmatprep.subr.mxu0 0.0
      %275 = vmatpush1.msra.mxu0 %v255
      %276 = vmatprep.subr.mxu0 0.0
      %277 = vmatpush1.msra.mxu0 %v256
      %278 = vmatprep.subr.mxu0 0.0
      %279 = vmatpush1.msra.mxu0 0.0
      %280 = vmatprep.subr.mxu0 0.0
      %281 = vmatpush1.msra.mxu0 0.0
      %282 = vmatprep.subr.mxu0 0.0
      %283 = vmatpush1.msra.mxu0 0.0
      %284 = vmatprep.subr.mxu0 0.0
      %285 = vmatpush1.msra.mxu0 0.0
      %286 = vmatprep.subr.mxu0 0.0
      %287 = vmatpush1.msra.mxu0 0.0
      %288 = vmatprep.subr.mxu0 0.0
      %289 = vmatpush1.msra.mxu0 0.0
      %290 = vmatprep.subr.mxu0 0.0
      %291 = vmatpush1.msra.mxu0 0.0
      %292 = vmatprep.subr.mxu0 0.0
      %293 = vmatpush1.msra.mxu0 0.0
      %294 = vmatprep.subr.mxu0 0.0
      %295 = vmatpush1.msra.mxu0 0.0
      %296 = vmatprep.subr.mxu0 0.0
      %297 = vmatpush1.msra.mxu0 0.0
      %298 = vmatprep.subr.mxu0 0.0
      %299 = vmatpush1.msra.mxu0 0.0
      %300 = vmatprep.subr.mxu0 0.0
      %301 = vmatpush1.msra.mxu0 0.0
      %302 = vmatprep.subr.mxu0 0.0
      %303 = vmatpush1.msra.mxu0 0.0
      %304 = vmatprep.subr.mxu0 0.0
      %305 = vmatpush1.msra.mxu0 0.0
      %306 = vmatprep.subr.mxu0 0.0
      %307 = vmatpush1.msra.mxu0 0.0
      %308 = vmatprep.subr.mxu0 0.0
      %309 = vmatpush1.msra.mxu0 0.0
      %310 = vmatprep.subr.mxu0 0.0
      %311 = vmatpush1.msra.mxu0 0.0
      %312 = vmatprep.subr.mxu0 0.0
      %313 = vmatpush1.msra.mxu0 0.0
      %314 = vmatprep.subr.mxu0 0.0
      %315 = vmatpush1.msra.mxu0 0.0
      %316 = vmatprep.subr.mxu0 0.0
      %317 = vmatpush1.msra.mxu0 0.0
      %318 = vmatprep.subr.mxu0 0.0
      %319 = vmatpush1.msra.mxu0 0.0
      %320 = vmatprep.subr.mxu0 0.0
      %321 = vmatpush1.msra.mxu0 0.0
      %322 = vmatprep.subr.mxu0 0.0
      %323 = vmatpush1.msra.mxu0 0.0
      %324 = vmatprep.subr.mxu0 0.0
      %325 = vmatpush1.msra.mxu0 0.0
      %326 = vmatprep.mubr.f32.mxu0 0.0
      %327 = vmatmul.mubr.f32.gmra.mrb[0].mxu0 %v260
      %v328 = vpop.f32.mrb[0].mxu0
      %v329 = vadd.f32 %v257, %v328
      %v330 = vpop.f32.mrb[0].mxu0
      %331 = vdwg.mxu0
      %v332 = vsub.f32 %v78, %v329
      %v333 = vmul.f32 %v332, %v332
      %p334 = scmp.lt.s32.totalorder %s79, 10
      %s335 = scalar_select %p334, 1, 0
      %s336 = scvt.s32.f32 %s335
      %v337 = vstv %s336
      %v338 = vmul.f32 %v333, %v337
      %v339 = vadd.f32 %v73, %v338
      %s340 = sadd.s32 %s79, 1
      %s341 = sld [smem:[#allocation3 + %s340]]
      %v342 = vstv %s341
      %v343 = vmul.f32 %v342, %v76
      %s344 = sld [smem:[#allocation6 + %s340]]
      %v345 = vstv %s344
      %v346 = vmul.f32 %v345, %v78
      %v347 = vadd.f32 %v343, %v346
      %v348 = vlaneseq
      %v349 = vshrl.u32 %v348, 7
      %v350 = vsub.s32 1, %v349
      %v351 = vrot.slane %v76, %v350
      %v352 = vmul.f32 %v351, %v104
      %v353 = vmul.f32 %v351, %v109
      %v354 = vmul.f32 %v351, %v114
      %v355 = vmul.f32 %v351, %v119
      %v356 = vmul.f32 %v351, %v124
      %v357 = vmul.f32 %v351, %v129
      %v358 = vmul.f32 %v351, %v134
      %v359 = vmul.f32 %v351, %v139
      %v360 = vlaneseq
      %v361 = vshrl.u32 %v360, 7
      %v362 = vsub.s32 1, %v361
      %v363 = vrot.slane %v347, %v362
      %v364 = vmul.f32 %v363, %v155
      %v365 = vmul.f32 %v363, %v159
      %v366 = vmul.f32 %v363, %v163
      %v367 = vmul.f32 %v363, %v167
      %v368 = vmul.f32 %v363, %v171
      %v369 = vmul.f32 %v363, %v175
      %v370 = vmul.f32 %v363, %v179
      %v371 = vmul.f32 %v363, %v183
      %v372 = vadd.f32 %v352, %v364
      %v373 = vadd.f32 %v353, %v365
      %v374 = vadd.f32 %v354, %v366
      %v375 = vadd.f32 %v355, %v367
      %v376 = vadd.f32 %v356, %v368
      %v377 = vadd.f32 %v357, %v369
      %v378 = vadd.f32 %v358, %v370
      %v379 = vadd.f32 %v359, %v371
      %380 = vset.pattern.permute.xlu0 1
      %381 = vperm.xlu0 %380, %v89
      %v382 = vpop.permute.xlu0 %381
      %384 = vset.pattern.permute.xlu0 1
      %385 = vperm.xlu0 %384, %v90
      %v386 = vpop.permute.xlu0 %385
      %388 = vset.pattern.permute.xlu0 1
      %389 = vperm.xlu0 %388, %v91
      %v390 = vpop.permute.xlu0 %389
      %392 = vset.pattern.permute.xlu0 1
      %393 = vperm.xlu0 %392, %v92
      %v394 = vpop.permute.xlu0 %393
      %396 = vset.pattern.permute.xlu0 1
      %397 = vperm.xlu0 %396, %v93
      %v398 = vpop.permute.xlu0 %397
      %400 = vset.pattern.permute.xlu0 1
      %401 = vperm.xlu0 %400, %v94
      %v402 = vpop.permute.xlu0 %401
      %404 = vset.pattern.permute.xlu0 1
      %405 = vperm.xlu0 %404, %v95
      %v406 = vpop.permute.xlu0 %405
      %408 = vset.pattern.permute.xlu0 1
      %409 = vperm.xlu0 %408, %v96
      %v410 = vpop.permute.xlu0 %409
      %v412 = vadd.f32 %v372, %v382
      %v413 = vadd.f32 %v373, %v386
      %v414 = vadd.f32 %v374, %v390
      %v415 = vadd.f32 %v375, %v394
      %v416 = vadd.f32 %v376, %v398
      %v417 = vadd.f32 %v377, %v402
      %v418 = vadd.f32 %v378, %v406
      %v419 = vadd.f32 %v379, %v410
      %v420 = vmax.f32 %v412, 0.0
      %v421 = vmax.f32 %v413, 0.0
      %v422 = vmax.f32 %v414, 0.0
      %v423 = vmax.f32 %v415, 0.0
      %v424 = vmax.f32 %v416, 0.0
      %v425 = vmax.f32 %v417, 0.0
      %v426 = vmax.f32 %v418, 0.0
      %v427 = vmax.f32 %v419, 0.0
      %428 = vmatprep.subr.mxu0 0.0
      %429 = vmatpush1.msra.mxu0 %v420
      %430 = vmatprep.subr.mxu0 0.0
      %431 = vmatpush1.msra.mxu0 %v421
      %432 = vmatprep.subr.mxu0 0.0
      %433 = vmatpush1.msra.mxu0 %v422
      %434 = vmatprep.subr.mxu0 0.0
      %435 = vmatpush1.msra.mxu0 %v423
      %436 = vmatprep.subr.mxu0 0.0
      %437 = vmatpush1.msra.mxu0 %v424
      %438 = vmatprep.subr.mxu0 0.0
      %439 = vmatpush1.msra.mxu0 %v425
      %440 = vmatprep.subr.mxu0 0.0
      %441 = vmatpush1.msra.mxu0 %v426
      %442 = vmatprep.subr.mxu0 0.0
      %443 = vmatpush1.msra.mxu0 %v427
      %444 = vmatprep.subr.mxu0 0.0
      %445 = vmatpush1.msra.mxu0 0.0
      %446 = vmatprep.subr.mxu0 0.0
      %447 = vmatpush1.msra.mxu0 0.0
      %448 = vmatprep.subr.mxu0 0.0
      %449 = vmatpush1.msra.mxu0 0.0
      %450 = vmatprep.subr.mxu0 0.0
      %451 = vmatpush1.msra.mxu0 0.0
      %452 = vmatprep.subr.mxu0 0.0
      %453 = vmatpush1.msra.mxu0 0.0
      %454 = vmatprep.subr.mxu0 0.0
      %455 = vmatpush1.msra.mxu0 0.0
      %456 = vmatprep.subr.mxu0 0.0
      %457 = vmatpush1.msra.mxu0 0.0
      %458 = vmatprep.subr.mxu0 0.0
      %459 = vmatpush1.msra.mxu0 0.0
      %460 = vmatprep.subr.mxu0 0.0
      %461 = vmatpush1.msra.mxu0 0.0
      %462 = vmatprep.subr.mxu0 0.0
      %463 = vmatpush1.msra.mxu0 0.0
      %464 = vmatprep.subr.mxu0 0.0
      %465 = vmatpush1.msra.mxu0 0.0
      %466 = vmatprep.subr.mxu0 0.0
      %467 = vmatpush1.msra.mxu0 0.0
      %468 = vmatprep.subr.mxu0 0.0
      %469 = vmatpush1.msra.mxu0 0.0
      %470 = vmatprep.subr.mxu0 0.0
      %471 = vmatpush1.msra.mxu0 0.0
      %472 = vmatprep.subr.mxu0 0.0
      %473 = vmatpush1.msra.mxu0 0.0
      %474 = vmatprep.subr.mxu0 0.0
      %475 = vmatpush1.msra.mxu0 0.0
      %476 = vmatprep.subr.mxu0 0.0
      %477 = vmatpush1.msra.mxu0 0.0
      %478 = vmatprep.subr.mxu0 0.0
      %479 = vmatpush1.msra.mxu0 0.0
      %480 = vmatprep.subr.mxu0 0.0
      %481 = vmatpush1.msra.mxu0 0.0
      %482 = vmatprep.subr.mxu0 0.0
      %483 = vmatpush1.msra.mxu0 0.0
      %484 = vmatprep.subr.mxu0 0.0
      %485 = vmatpush1.msra.mxu0 0.0
      %486 = vmatprep.subr.mxu0 0.0
      %487 = vmatpush1.msra.mxu0 0.0
      %488 = vmatprep.subr.mxu0 0.0
      %489 = vmatpush1.msra.mxu0 0.0
      %490 = vmatprep.subr.mxu0 0.0
      %491 = vmatpush1.msra.mxu0 0.0
      %492 = vmatprep.mubr.f32.mxu0 0.0
      %493 = vmatmul.mubr.f32.gmra.mrb[0].mxu0 %v260
      %v494 = vpop.f32.mrb[0].mxu0
      %v495 = vadd.f32 %v257, %v494
      %v496 = vpop.f32.mrb[0].mxu0
      %497 = vdwg.mxu0
      %v499 = vrot.slane %v495, 7
      %v501 = vsub.f32 %v78, %v499
      %v502 = vmul.f32 %v501, %v501
      %p503 = scmp.lt.s32.totalorder %s340, 10
      %s504 = scalar_select %p503, 1, 0
      %s505 = scvt.s32.f32 %s504
      %v506 = vstv %s505
      %v507 = vmul.f32 %v502, %v506
      %v509 = vrot.slane %v507, 1
      %v511 = vadd.f32 %v339, %v509
      %s512 = sadd.s32 %s79, 2
      %s513 = sld [smem:[#allocation3 + %s512]]
      %v514 = vstv %s513
      %v515 = vmul.f32 %v514, %v76
      %s516 = sld [smem:[#allocation6 + %s512]]
      %v517 = vstv %s516
      %v518 = vmul.f32 %v517, %v78
      %v519 = vadd.f32 %v515, %v518
      %v520 = vlaneseq
      %v521 = vshrl.u32 %v520, 7
      %v522 = vsub.s32 2, %v521
      %v523 = vrot.slane %v76, %v522
      %v524 = vmul.f32 %v523, %v104
      %v525 = vmul.f32 %v523, %v109
      %v526 = vmul.f32 %v523, %v114
      %v527 = vmul.f32 %v523, %v119
      %v528 = vmul.f32 %v523, %v124
      %v529 = vmul.f32 %v523, %v129
      %v530 = vmul.f32 %v523, %v134
      %v531 = vmul.f32 %v523, %v139
      %v532 = vlaneseq
      %v533 = vshrl.u32 %v532, 7
      %v534 = vsub.s32 2, %v533
      %v535 = vrot.slane %v519, %v534
      %v536 = vmul.f32 %v535, %v155
      %v537 = vmul.f32 %v535, %v159
      %v538 = vmul.f32 %v535, %v163
      %v539 = vmul.f32 %v535, %v167
      %v540 = vmul.f32 %v535, %v171
      %v541 = vmul.f32 %v535, %v175
      %v542 = vmul.f32 %v535, %v179
      %v543 = vmul.f32 %v535, %v183
      %v544 = vadd.f32 %v524, %v536
      %v545 = vadd.f32 %v525, %v537
      %v546 = vadd.f32 %v526, %v538
      %v547 = vadd.f32 %v527, %v539
      %v548 = vadd.f32 %v528, %v540
      %v549 = vadd.f32 %v529, %v541
      %v550 = vadd.f32 %v530, %v542
      %v551 = vadd.f32 %v531, %v543
      %552 = vset.pattern.permute.xlu0 2
      %553 = vperm.xlu0 %552, %v89
      %v554 = vpop.permute.xlu0 %553
      %556 = vset.pattern.permute.xlu0 2
      %557 = vperm.xlu0 %556, %v90
      %v558 = vpop.permute.xlu0 %557
      %560 = vset.pattern.permute.xlu0 2
      %561 = vperm.xlu0 %560, %v91
      %v562 = vpop.permute.xlu0 %561
      %564 = vset.pattern.permute.xlu0 2
      %565 = vperm.xlu0 %564, %v92
      %v566 = vpop.permute.xlu0 %565
      %568 = vset.pattern.permute.xlu0 2
      %569 = vperm.xlu0 %568, %v93
      %v570 = vpop.permute.xlu0 %569
      %572 = vset.pattern.permute.xlu0 2
      %573 = vperm.xlu0 %572, %v94
      %v574 = vpop.permute.xlu0 %573
      %576 = vset.pattern.permute.xlu0 2
      %577 = vperm.xlu0 %576, %v95
      %v578 = vpop.permute.xlu0 %577
      %580 = vset.pattern.permute.xlu0 2
      %581 = vperm.xlu0 %580, %v96
      %v582 = vpop.permute.xlu0 %581
      %v584 = vadd.f32 %v544, %v554
      %v585 = vadd.f32 %v545, %v558
      %v586 = vadd.f32 %v546, %v562
      %v587 = vadd.f32 %v547, %v566
      %v588 = vadd.f32 %v548, %v570
      %v589 = vadd.f32 %v549, %v574
      %v590 = vadd.f32 %v550, %v578
      %v591 = vadd.f32 %v551, %v582
      %v592 = vmax.f32 %v584, 0.0
      %v593 = vmax.f32 %v585, 0.0
      %v594 = vmax.f32 %v586, 0.0
      %v595 = vmax.f32 %v587, 0.0
      %v596 = vmax.f32 %v588, 0.0
      %v597 = vmax.f32 %v589, 0.0
      %v598 = vmax.f32 %v590, 0.0
      %v599 = vmax.f32 %v591, 0.0
      %600 = vmatprep.subr.mxu0 0.0
      %601 = vmatpush1.msra.mxu0 %v592
      %602 = vmatprep.subr.mxu0 0.0
      %603 = vmatpush1.msra.mxu0 %v593
      %604 = vmatprep.subr.mxu0 0.0
      %605 = vmatpush1.msra.mxu0 %v594
      %606 = vmatprep.subr.mxu0 0.0
      %607 = vmatpush1.msra.mxu0 %v595
      %608 = vmatprep.subr.mxu0 0.0
      %609 = vmatpush1.msra.mxu0 %v596
      %610 = vmatprep.subr.mxu0 0.0
      %611 = vmatpush1.msra.mxu0 %v597
      %612 = vmatprep.subr.mxu0 0.0
      %613 = vmatpush1.msra.mxu0 %v598
      %614 = vmatprep.subr.mxu0 0.0
      %615 = vmatpush1.msra.mxu0 %v599
      %616 = vmatprep.subr.mxu0 0.0
      %617 = vmatpush1.msra.mxu0 0.0
      %618 = vmatprep.subr.mxu0 0.0
      %619 = vmatpush1.msra.mxu0 0.0
      %620 = vmatprep.subr.mxu0 0.0
      %621 = vmatpush1.msra.mxu0 0.0
      %622 = vmatprep.subr.mxu0 0.0
      %623 = vmatpush1.msra.mxu0 0.0
      %624 = vmatprep.subr.mxu0 0.0
      %625 = vmatpush1.msra.mxu0 0.0
      %626 = vmatprep.subr.mxu0 0.0
      %627 = vmatpush1.msra.mxu0 0.0
      %628 = vmatprep.subr.mxu0 0.0
      %629 = vmatpush1.msra.mxu0 0.0
      %630 = vmatprep.subr.mxu0 0.0
      %631 = vmatpush1.msra.mxu0 0.0
      %632 = vmatprep.subr.mxu0 0.0
      %633 = vmatpush1.msra.mxu0 0.0
      %634 = vmatprep.subr.mxu0 0.0
      %635 = vmatpush1.msra.mxu0 0.0
      %636 = vmatprep.subr.mxu0 0.0
      %637 = vmatpush1.msra.mxu0 0.0
      %638 = vmatprep.subr.mxu0 0.0
      %639 = vmatpush1.msra.mxu0 0.0
      %640 = vmatprep.subr.mxu0 0.0
      %641 = vmatpush1.msra.mxu0 0.0
      %642 = vmatprep.subr.mxu0 0.0
      %643 = vmatpush1.msra.mxu0 0.0
      %644 = vmatprep.subr.mxu0 0.0
      %645 = vmatpush1.msra.mxu0 0.0
      %646 = vmatprep.subr.mxu0 0.0
      %647 = vmatpush1.msra.mxu0 0.0
      %648 = vmatprep.subr.mxu0 0.0
      %649 = vmatpush1.msra.mxu0 0.0
      %650 = vmatprep.subr.mxu0 0.0
      %651 = vmatpush1.msra.mxu0 0.0
      %652 = vmatprep.subr.mxu0 0.0
      %653 = vmatpush1.msra.mxu0 0.0
      %654 = vmatprep.subr.mxu0 0.0
      %655 = vmatpush1.msra.mxu0 0.0
      %656 = vmatprep.subr.mxu0 0.0
      %657 = vmatpush1.msra.mxu0 0.0
      %658 = vmatprep.subr.mxu0 0.0
      %659 = vmatpush1.msra.mxu0 0.0
      %660 = vmatprep.subr.mxu0 0.0
      %661 = vmatpush1.msra.mxu0 0.0
      %662 = vmatprep.subr.mxu0 0.0
      %663 = vmatpush1.msra.mxu0 0.0
      %664 = vmatprep.mubr.f32.mxu0 0.0
      %665 = vmatmul.mubr.f32.gmra.mrb[0].mxu0 %v260
      %v666 = vpop.f32.mrb[0].mxu0
      %v667 = vadd.f32 %v257, %v666
      %v668 = vpop.f32.mrb[0].mxu0
      %669 = vdwg.mxu0
      %v671 = vrot.slane %v667, 6
      %v673 = vsub.f32 %v78, %v671
      %v674 = vmul.f32 %v673, %v673
      %p675 = scmp.lt.s32.totalorder %s512, 10
      %s676 = scalar_select %p675, 1, 0
      %s677 = scvt.s32.f32 %s676
      %v678 = vstv %s677
      %v679 = vmul.f32 %v674, %v678
      %v681 = vrot.slane %v679, 2
      %v683 = vadd.f32 %v511, %v681
      %s684 = sadd.s32 %s79, 3
      %s685 = sld [smem:[#allocation3 + %s684]]
      %v686 = vstv %s685
      %v687 = vmul.f32 %v686, %v76
      %s688 = sld [smem:[#allocation6 + %s684]]
      %v689 = vstv %s688
      %v690 = vmul.f32 %v689, %v78
      %v691 = vadd.f32 %v687, %v690
      %v692 = vlaneseq
      %v693 = vshrl.u32 %v692, 7
      %v694 = vsub.s32 3, %v693
      %v695 = vrot.slane %v76, %v694
      %v696 = vmul.f32 %v695, %v104
      %v697 = vmul.f32 %v695, %v109
      %v698 = vmul.f32 %v695, %v114
      %v699 = vmul.f32 %v695, %v119
      %v700 = vmul.f32 %v695, %v124
      %v701 = vmul.f32 %v695, %v129
      %v702 = vmul.f32 %v695, %v134
      %v703 = vmul.f32 %v695, %v139
      %v704 = vlaneseq
      %v705 = vshrl.u32 %v704, 7
      %v706 = vsub.s32 3, %v705
      %v707 = vrot.slane %v691, %v706
      %v708 = vmul.f32 %v707, %v155
      %v709 = vmul.f32 %v707, %v159
      %v710 = vmul.f32 %v707, %v163
      %v711 = vmul.f32 %v707, %v167
      %v712 = vmul.f32 %v707, %v171
      %v713 = vmul.f32 %v707, %v175
      %v714 = vmul.f32 %v707, %v179
      %v715 = vmul.f32 %v707, %v183
      %v716 = vadd.f32 %v696, %v708
      %v717 = vadd.f32 %v697, %v709
      %v718 = vadd.f32 %v698, %v710
      %v719 = vadd.f32 %v699, %v711
      %v720 = vadd.f32 %v700, %v712
      %v721 = vadd.f32 %v701, %v713
      %v722 = vadd.f32 %v702, %v714
      %v723 = vadd.f32 %v703, %v715
      %724 = vset.pattern.permute.xlu0 3
      %725 = vperm.xlu0 %724, %v89
      %v726 = vpop.permute.xlu0 %725
      %728 = vset.pattern.permute.xlu0 3
      %729 = vperm.xlu0 %728, %v90
      %v730 = vpop.permute.xlu0 %729
      %732 = vset.pattern.permute.xlu0 3
      %733 = vperm.xlu0 %732, %v91
      %v734 = vpop.permute.xlu0 %733
      %736 = vset.pattern.permute.xlu0 3
      %737 = vperm.xlu0 %736, %v92
      %v738 = vpop.permute.xlu0 %737
      %740 = vset.pattern.permute.xlu0 3
      %741 = vperm.xlu0 %740, %v93
      %v742 = vpop.permute.xlu0 %741
      %744 = vset.pattern.permute.xlu0 3
      %745 = vperm.xlu0 %744, %v94
      %v746 = vpop.permute.xlu0 %745
      %748 = vset.pattern.permute.xlu0 3
      %749 = vperm.xlu0 %748, %v95
      %v750 = vpop.permute.xlu0 %749
      %752 = vset.pattern.permute.xlu0 3
      %753 = vperm.xlu0 %752, %v96
      %v754 = vpop.permute.xlu0 %753
      %v756 = vadd.f32 %v716, %v726
      %v757 = vadd.f32 %v717, %v730
      %v758 = vadd.f32 %v718, %v734
      %v759 = vadd.f32 %v719, %v738
      %v760 = vadd.f32 %v720, %v742
      %v761 = vadd.f32 %v721, %v746
      %v762 = vadd.f32 %v722, %v750
      %v763 = vadd.f32 %v723, %v754
      %v764 = vmax.f32 %v756, 0.0
      %v765 = vmax.f32 %v757, 0.0
      %v766 = vmax.f32 %v758, 0.0
      %v767 = vmax.f32 %v759, 0.0
      %v768 = vmax.f32 %v760, 0.0
      %v769 = vmax.f32 %v761, 0.0
      %v770 = vmax.f32 %v762, 0.0
      %v771 = vmax.f32 %v763, 0.0
      %772 = vmatprep.subr.mxu0 0.0
      %773 = vmatpush1.msra.mxu0 %v764
      %774 = vmatprep.subr.mxu0 0.0
      %775 = vmatpush1.msra.mxu0 %v765
      %776 = vmatprep.subr.mxu0 0.0
      %777 = vmatpush1.msra.mxu0 %v766
      %778 = vmatprep.subr.mxu0 0.0
      %779 = vmatpush1.msra.mxu0 %v767
      %780 = vmatprep.subr.mxu0 0.0
      %781 = vmatpush1.msra.mxu0 %v768
      %782 = vmatprep.subr.mxu0 0.0
      %783 = vmatpush1.msra.mxu0 %v769
      %784 = vmatprep.subr.mxu0 0.0
      %785 = vmatpush1.msra.mxu0 %v770
      %786 = vmatprep.subr.mxu0 0.0
      %787 = vmatpush1.msra.mxu0 %v771
      %788 = vmatprep.subr.mxu0 0.0
      %789 = vmatpush1.msra.mxu0 0.0
      %790 = vmatprep.subr.mxu0 0.0
      %791 = vmatpush1.msra.mxu0 0.0
      %792 = vmatprep.subr.mxu0 0.0
      %793 = vmatpush1.msra.mxu0 0.0
      %794 = vmatprep.subr.mxu0 0.0
      %795 = vmatpush1.msra.mxu0 0.0
      %796 = vmatprep.subr.mxu0 0.0
      %797 = vmatpush1.msra.mxu0 0.0
      %798 = vmatprep.subr.mxu0 0.0
      %799 = vmatpush1.msra.mxu0 0.0
      %800 = vmatprep.subr.mxu0 0.0
      %801 = vmatpush1.msra.mxu0 0.0
      %802 = vmatprep.subr.mxu0 0.0
      %803 = vmatpush1.msra.mxu0 0.0
      %804 = vmatprep.subr.mxu0 0.0
      %805 = vmatpush1.msra.mxu0 0.0
      %806 = vmatprep.subr.mxu0 0.0
      %807 = vmatpush1.msra.mxu0 0.0
      %808 = vmatprep.subr.mxu0 0.0
      %809 = vmatpush1.msra.mxu0 0.0
      %810 = vmatprep.subr.mxu0 0.0
      %811 = vmatpush1.msra.mxu0 0.0
      %812 = vmatprep.subr.mxu0 0.0
      %813 = vmatpush1.msra.mxu0 0.0
      %814 = vmatprep.subr.mxu0 0.0
      %815 = vmatpush1.msra.mxu0 0.0
      %816 = vmatprep.subr.mxu0 0.0
      %817 = vmatpush1.msra.mxu0 0.0
      %818 = vmatprep.subr.mxu0 0.0
      %819 = vmatpush1.msra.mxu0 0.0
      %820 = vmatprep.subr.mxu0 0.0
      %821 = vmatpush1.msra.mxu0 0.0
      %822 = vmatprep.subr.mxu0 0.0
      %823 = vmatpush1.msra.mxu0 0.0
      %824 = vmatprep.subr.mxu0 0.0
      %825 = vmatpush1.msra.mxu0 0.0
      %826 = vmatprep.subr.mxu0 0.0
      %827 = vmatpush1.msra.mxu0 0.0
      %828 = vmatprep.subr.mxu0 0.0
      %829 = vmatpush1.msra.mxu0 0.0
      %830 = vmatprep.subr.mxu0 0.0
      %831 = vmatpush1.msra.mxu0 0.0
      %832 = vmatprep.subr.mxu0 0.0
      %833 = vmatpush1.msra.mxu0 0.0
      %834 = vmatprep.subr.mxu0 0.0
      %835 = vmatpush1.msra.mxu0 0.0
      %836 = vmatprep.mubr.f32.mxu0 0.0
      %837 = vmatmul.mubr.f32.gmra.mrb[0].mxu0 %v260
      %v838 = vpop.f32.mrb[0].mxu0
      %v839 = vadd.f32 %v257, %v838
      %v840 = vpop.f32.mrb[0].mxu0
      %841 = vdwg.mxu0
      %v843 = vrot.slane %v839, 5
      %v845 = vsub.f32 %v78, %v843
      %v846 = vmul.f32 %v845, %v845
      %p847 = scmp.lt.s32.totalorder %s684, 10
      %s848 = scalar_select %p847, 1, 0
      %s849 = scvt.s32.f32 %s848
      %v850 = vstv %s849
      %v851 = vmul.f32 %v846, %v850
      %v853 = vrot.slane %v851, 3
      %v855 = vadd.f32 %v683, %v853
      %s856 = sadd.s32 %s79, 4
      %s857 = sld [smem:[#allocation3 + %s856]]
      %v858 = vstv %s857
      %v859 = vmul.f32 %v858, %v76
      %s860 = sld [smem:[#allocation6 + %s856]]
      %v861 = vstv %s860
      %v862 = vmul.f32 %v861, %v78
      %v863 = vadd.f32 %v859, %v862
      %v864 = vlaneseq
      %v865 = vshrl.u32 %v864, 7
      %v866 = vsub.s32 4, %v865
      %v867 = vrot.slane %v76, %v866
      %v868 = vmul.f32 %v867, %v104
      %v869 = vmul.f32 %v867, %v109
      %v870 = vmul.f32 %v867, %v114
      %v871 = vmul.f32 %v867, %v119
      %v872 = vmul.f32 %v867, %v124
      %v873 = vmul.f32 %v867, %v129
      %v874 = vmul.f32 %v867, %v134
      %v875 = vmul.f32 %v867, %v139
      %v876 = vlaneseq
      %v877 = vshrl.u32 %v876, 7
      %v878 = vsub.s32 4, %v877
      %v879 = vrot.slane %v863, %v878
      %v880 = vmul.f32 %v879, %v155
      %v881 = vmul.f32 %v879, %v159
      %v882 = vmul.f32 %v879, %v163
      %v883 = vmul.f32 %v879, %v167
      %v884 = vmul.f32 %v879, %v171
      %v885 = vmul.f32 %v879, %v175
      %v886 = vmul.f32 %v879, %v179
      %v887 = vmul.f32 %v879, %v183
      %v888 = vadd.f32 %v868, %v880
      %v889 = vadd.f32 %v869, %v881
      %v890 = vadd.f32 %v870, %v882
      %v891 = vadd.f32 %v871, %v883
      %v892 = vadd.f32 %v872, %v884
      %v893 = vadd.f32 %v873, %v885
      %v894 = vadd.f32 %v874, %v886
      %v895 = vadd.f32 %v875, %v887
      %896 = vset.pattern.permute.xlu0 4
      %897 = vperm.xlu0 %896, %v89
      %v898 = vpop.permute.xlu0 %897
      %900 = vset.pattern.permute.xlu0 4
      %901 = vperm.xlu0 %900, %v90
      %v902 = vpop.permute.xlu0 %901
      %904 = vset.pattern.permute.xlu0 4
      %905 = vperm.xlu0 %904, %v91
      %v906 = vpop.permute.xlu0 %905
      %908 = vset.pattern.permute.xlu0 4
      %909 = vperm.xlu0 %908, %v92
      %v910 = vpop.permute.xlu0 %909
      %912 = vset.pattern.permute.xlu0 4
      %913 = vperm.xlu0 %912, %v93
      %v914 = vpop.permute.xlu0 %913
      %916 = vset.pattern.permute.xlu0 4
      %917 = vperm.xlu0 %916, %v94
      %v918 = vpop.permute.xlu0 %917
      %920 = vset.pattern.permute.xlu0 4
      %921 = vperm.xlu0 %920, %v95
      %v922 = vpop.permute.xlu0 %921
      %924 = vset.pattern.permute.xlu0 4
      %925 = vperm.xlu0 %924, %v96
      %v926 = vpop.permute.xlu0 %925
      %v928 = vadd.f32 %v888, %v898
      %v929 = vadd.f32 %v889, %v902
      %v930 = vadd.f32 %v890, %v906
      %v931 = vadd.f32 %v891, %v910
      %v932 = vadd.f32 %v892, %v914
      %v933 = vadd.f32 %v893, %v918
      %v934 = vadd.f32 %v894, %v922
      %v935 = vadd.f32 %v895, %v926
      %v936 = vmax.f32 %v928, 0.0
      %v937 = vmax.f32 %v929, 0.0
      %v938 = vmax.f32 %v930, 0.0
      %v939 = vmax.f32 %v931, 0.0
      %v940 = vmax.f32 %v932, 0.0
      %v941 = vmax.f32 %v933, 0.0
      %v942 = vmax.f32 %v934, 0.0
      %v943 = vmax.f32 %v935, 0.0
      %944 = vmatprep.subr.mxu0 0.0
      %945 = vmatpush1.msra.mxu0 %v936
      %946 = vmatprep.subr.mxu0 0.0
      %947 = vmatpush1.msra.mxu0 %v937
      %948 = vmatprep.subr.mxu0 0.0
      %949 = vmatpush1.msra.mxu0 %v938
      %950 = vmatprep.subr.mxu0 0.0
      %951 = vmatpush1.msra.mxu0 %v939
      %952 = vmatprep.subr.mxu0 0.0
      %953 = vmatpush1.msra.mxu0 %v940
      %954 = vmatprep.subr.mxu0 0.0
      %955 = vmatpush1.msra.mxu0 %v941
      %956 = vmatprep.subr.mxu0 0.0
      %957 = vmatpush1.msra.mxu0 %v942
      %958 = vmatprep.subr.mxu0 0.0
      %959 = vmatpush1.msra.mxu0 %v943
      %960 = vmatprep.subr.mxu0 0.0
      %961 = vmatpush1.msra.mxu0 0.0
      %962 = vmatprep.subr.mxu0 0.0
      %963 = vmatpush1.msra.mxu0 0.0
      %964 = vmatprep.subr.mxu0 0.0
      %965 = vmatpush1.msra.mxu0 0.0
      %966 = vmatprep.subr.mxu0 0.0
      %967 = vmatpush1.msra.mxu0 0.0
      %968 = vmatprep.subr.mxu0 0.0
      %969 = vmatpush1.msra.mxu0 0.0
      %970 = vmatprep.subr.mxu0 0.0
      %971 = vmatpush1.msra.mxu0 0.0
      %972 = vmatprep.subr.mxu0 0.0
      %973 = vmatpush1.msra.mxu0 0.0
      %974 = vmatprep.subr.mxu0 0.0
      %975 = vmatpush1.msra.mxu0 0.0
      %976 = vmatprep.subr.mxu0 0.0
      %977 = vmatpush1.msra.mxu0 0.0
      %978 = vmatprep.subr.mxu0 0.0
      %979 = vmatpush1.msra.mxu0 0.0
      %980 = vmatprep.subr.mxu0 0.0
      %981 = vmatpush1.msra.mxu0 0.0
      %982 = vmatprep.subr.mxu0 0.0
      %983 = vmatpush1.msra.mxu0 0.0
      %984 = vmatprep.subr.mxu0 0.0
      %985 = vmatpush1.msra.mxu0 0.0
      %986 = vmatprep.subr.mxu0 0.0
      %987 = vmatpush1.msra.mxu0 0.0
      %988 = vmatprep.subr.mxu0 0.0
      %989 = vmatpush1.msra.mxu0 0.0
      %990 = vmatprep.subr.mxu0 0.0
      %991 = vmatpush1.msra.mxu0 0.0
      %992 = vmatprep.subr.mxu0 0.0
      %993 = vmatpush1.msra.mxu0 0.0
      %994 = vmatprep.subr.mxu0 0.0
      %995 = vmatpush1.msra.mxu0 0.0
      %996 = vmatprep.subr.mxu0 0.0
      %997 = vmatpush1.msra.mxu0 0.0
      %998 = vmatprep.subr.mxu0 0.0
      %999 = vmatpush1.msra.mxu0 0.0
      %1000 = vmatprep.subr.mxu0 0.0
      %1001 = vmatpush1.msra.mxu0 0.0
      %1002 = vmatprep.subr.mxu0 0.0
      %1003 = vmatpush1.msra.mxu0 0.0
      %1004 = vmatprep.subr.mxu0 0.0
      %1005 = vmatpush1.msra.mxu0 0.0
      %1006 = vmatprep.subr.mxu0 0.0
      %1007 = vmatpush1.msra.mxu0 0.0
      %1008 = vmatprep.mubr.f32.mxu0 0.0
      %1009 = vmatmul.mubr.f32.gmra.mrb[0].mxu0 %v260
      %v1010 = vpop.f32.mrb[0].mxu0
      %v1011 = vadd.f32 %v257, %v1010
      %v1012 = vpop.f32.mrb[0].mxu0
      %1013 = vdwg.mxu0
      %v1015 = vrot.slane %v1011, 4
      %v1017 = vsub.f32 %v78, %v1015
      %v1018 = vmul.f32 %v1017, %v1017
      %p1019 = scmp.lt.s32.totalorder %s856, 10
      %s1020 = scalar_select %p1019, 1, 0
      %s1021 = scvt.s32.f32 %s1020
      %v1022 = vstv %s1021
      %v1023 = vmul.f32 %v1018, %v1022
      %v1025 = vrot.slane %v1023, 4
      %v1027 = vadd.f32 %v855, %v1025
      %s1028 = sadd.s32 %s79, 5
      %s1029 = sld [smem:[#allocation3 + %s1028]]
      %v1030 = vstv %s1029
      %v1031 = vmul.f32 %v1030, %v76
      %s1032 = sld [smem:[#allocation6 + %s1028]]
      %v1033 = vstv %s1032
      %v1034 = vmul.f32 %v1033, %v78
      %v1035 = vadd.f32 %v1031, %v1034
      %v1036 = vlaneseq
      %v1037 = vshrl.u32 %v1036, 7
      %v1038 = vsub.s32 5, %v1037
      %v1039 = vrot.slane %v76, %v1038
      %v1040 = vmul.f32 %v1039, %v104
      %v1041 = vmul.f32 %v1039, %v109
      %v1042 = vmul.f32 %v1039, %v114
      %v1043 = vmul.f32 %v1039, %v119
      %v1044 = vmul.f32 %v1039, %v124
      %v1045 = vmul.f32 %v1039, %v129
      %v1046 = vmul.f32 %v1039, %v134
      %v1047 = vmul.f32 %v1039, %v139
      %v1048 = vlaneseq
      %v1049 = vshrl.u32 %v1048, 7
      %v1050 = vsub.s32 5, %v1049
      %v1051 = vrot.slane %v1035, %v1050
      %v1052 = vmul.f32 %v1051, %v155
      %v1053 = vmul.f32 %v1051, %v159
      %v1054 = vmul.f32 %v1051, %v163
      %v1055 = vmul.f32 %v1051, %v167
      %v1056 = vmul.f32 %v1051, %v171
      %v1057 = vmul.f32 %v1051, %v175
      %v1058 = vmul.f32 %v1051, %v179
      %v1059 = vmul.f32 %v1051, %v183
      %v1060 = vadd.f32 %v1040, %v1052
      %v1061 = vadd.f32 %v1041, %v1053
      %v1062 = vadd.f32 %v1042, %v1054
      %v1063 = vadd.f32 %v1043, %v1055
      %v1064 = vadd.f32 %v1044, %v1056
      %v1065 = vadd.f32 %v1045, %v1057
      %v1066 = vadd.f32 %v1046, %v1058
      %v1067 = vadd.f32 %v1047, %v1059
      %1068 = vset.pattern.permute.xlu0 5
      %1069 = vperm.xlu0 %1068, %v89
      %v1070 = vpop.permute.xlu0 %1069
      %1072 = vset.pattern.permute.xlu0 5
      %1073 = vperm.xlu0 %1072, %v90
      %v1074 = vpop.permute.xlu0 %1073
      %1076 = vset.pattern.permute.xlu0 5
      %1077 = vperm.xlu0 %1076, %v91
      %v1078 = vpop.permute.xlu0 %1077
      %1080 = vset.pattern.permute.xlu0 5
      %1081 = vperm.xlu0 %1080, %v92
      %v1082 = vpop.permute.xlu0 %1081
      %1084 = vset.pattern.permute.xlu0 5
      %1085 = vperm.xlu0 %1084, %v93
      %v1086 = vpop.permute.xlu0 %1085
      %1088 = vset.pattern.permute.xlu0 5
      %1089 = vperm.xlu0 %1088, %v94
      %v1090 = vpop.permute.xlu0 %1089
      %1092 = vset.pattern.permute.xlu0 5
      %1093 = vperm.xlu0 %1092, %v95
      %v1094 = vpop.permute.xlu0 %1093
      %1096 = vset.pattern.permute.xlu0 5
      %1097 = vperm.xlu0 %1096, %v96
      %v1098 = vpop.permute.xlu0 %1097
      %v1100 = vadd.f32 %v1060, %v1070
      %v1101 = vadd.f32 %v1061, %v1074
      %v1102 = vadd.f32 %v1062, %v1078
      %v1103 = vadd.f32 %v1063, %v1082
      %v1104 = vadd.f32 %v1064, %v1086
      %v1105 = vadd.f32 %v1065, %v1090
      %v1106 = vadd.f32 %v1066, %v1094
      %v1107 = vadd.f32 %v1067, %v1098
      %v1108 = vmax.f32 %v1100, 0.0
      %v1109 = vmax.f32 %v1101, 0.0
      %v1110 = vmax.f32 %v1102, 0.0
      %v1111 = vmax.f32 %v1103, 0.0
      %v1112 = vmax.f32 %v1104, 0.0
      %v1113 = vmax.f32 %v1105, 0.0
      %v1114 = vmax.f32 %v1106, 0.0
      %v1115 = vmax.f32 %v1107, 0.0
      %1116 = vmatprep.subr.mxu0 0.0
      %1117 = vmatpush1.msra.mxu0 %v1108
      %1118 = vmatprep.subr.mxu0 0.0
      %1119 = vmatpush1.msra.mxu0 %v1109
      %1120 = vmatprep.subr.mxu0 0.0
      %1121 = vmatpush1.msra.mxu0 %v1110
      %1122 = vmatprep.subr.mxu0 0.0
      %1123 = vmatpush1.msra.mxu0 %v1111
      %1124 = vmatprep.subr.mxu0 0.0
      %1125 = vmatpush1.msra.mxu0 %v1112
      %1126 = vmatprep.subr.mxu0 0.0
      %1127 = vmatpush1.msra.mxu0 %v1113
      %1128 = vmatprep.subr.mxu0 0.0
      %1129 = vmatpush1.msra.mxu0 %v1114
      %1130 = vmatprep.subr.mxu0 0.0
      %1131 = vmatpush1.msra.mxu0 %v1115
      %1132 = vmatprep.subr.mxu0 0.0
      %1133 = vmatpush1.msra.mxu0 0.0
      %1134 = vmatprep.subr.mxu0 0.0
      %1135 = vmatpush1.msra.mxu0 0.0
      %1136 = vmatprep.subr.mxu0 0.0
      %1137 = vmatpush1.msra.mxu0 0.0
      %1138 = vmatprep.subr.mxu0 0.0
      %1139 = vmatpush1.msra.mxu0 0.0
      %1140 = vmatprep.subr.mxu0 0.0
      %1141 = vmatpush1.msra.mxu0 0.0
      %1142 = vmatprep.subr.mxu0 0.0
      %1143 = vmatpush1.msra.mxu0 0.0
      %1144 = vmatprep.subr.mxu0 0.0
      %1145 = vmatpush1.msra.mxu0 0.0
      %1146 = vmatprep.subr.mxu0 0.0
      %1147 = vmatpush1.msra.mxu0 0.0
      %1148 = vmatprep.subr.mxu0 0.0
      %1149 = vmatpush1.msra.mxu0 0.0
      %1150 = vmatprep.subr.mxu0 0.0
      %1151 = vmatpush1.msra.mxu0 0.0
      %1152 = vmatprep.subr.mxu0 0.0
      %1153 = vmatpush1.msra.mxu0 0.0
      %1154 = vmatprep.subr.mxu0 0.0
      %1155 = vmatpush1.msra.mxu0 0.0
      %1156 = vmatprep.subr.mxu0 0.0
      %1157 = vmatpush1.msra.mxu0 0.0
      %1158 = vmatprep.subr.mxu0 0.0
      %1159 = vmatpush1.msra.mxu0 0.0
      %1160 = vmatprep.subr.mxu0 0.0
      %1161 = vmatpush1.msra.mxu0 0.0
      %1162 = vmatprep.subr.mxu0 0.0
      %1163 = vmatpush1.msra.mxu0 0.0
      %1164 = vmatprep.subr.mxu0 0.0
      %1165 = vmatpush1.msra.mxu0 0.0
      %1166 = vmatprep.subr.mxu0 0.0
      %1167 = vmatpush1.msra.mxu0 0.0
      %1168 = vmatprep.subr.mxu0 0.0
      %1169 = vmatpush1.msra.mxu0 0.0
      %1170 = vmatprep.subr.mxu0 0.0
      %1171 = vmatpush1.msra.mxu0 0.0
      %1172 = vmatprep.subr.mxu0 0.0
      %1173 = vmatpush1.msra.mxu0 0.0
      %1174 = vmatprep.subr.mxu0 0.0
      %1175 = vmatpush1.msra.mxu0 0.0
      %1176 = vmatprep.subr.mxu0 0.0
      %1177 = vmatpush1.msra.mxu0 0.0
      %1178 = vmatprep.subr.mxu0 0.0
      %1179 = vmatpush1.msra.mxu0 0.0
      %1180 = vmatprep.mubr.f32.mxu0 0.0
      %1181 = vmatmul.mubr.f32.gmra.mrb[0].mxu0 %v260
      %v1182 = vpop.f32.mrb[0].mxu0
      %v1183 = vadd.f32 %v257, %v1182
      %v1184 = vpop.f32.mrb[0].mxu0
      %1185 = vdwg.mxu0
      %v1187 = vrot.slane %v1183, 3
      %v1189 = vsub.f32 %v78, %v1187
      %v1190 = vmul.f32 %v1189, %v1189
      %p1191 = scmp.lt.s32.totalorder %s1028, 10
      %s1192 = scalar_select %p1191, 1, 0
      %s1193 = scvt.s32.f32 %s1192
      %v1194 = vstv %s1193
      %v1195 = vmul.f32 %v1190, %v1194
      %v1197 = vrot.slane %v1195, 5
      %v1199 = vadd.f32 %v1027, %v1197
      %s1200 = sadd.s32 %s79, 6
      %s1201 = sld [smem:[#allocation3 + %s1200]]
      %v1202 = vstv %s1201
      %v1203 = vmul.f32 %v1202, %v76
      %s1204 = sld [smem:[#allocation6 + %s1200]]
      %v1205 = vstv %s1204
      %v1206 = vmul.f32 %v1205, %v78
      %v1207 = vadd.f32 %v1203, %v1206
      %v1208 = vlaneseq
      %v1209 = vshrl.u32 %v1208, 7
      %v1210 = vsub.s32 6, %v1209
      %v1211 = vrot.slane %v76, %v1210
      %v1212 = vmul.f32 %v1211, %v104
      %v1213 = vmul.f32 %v1211, %v109
      %v1214 = vmul.f32 %v1211, %v114
      %v1215 = vmul.f32 %v1211, %v119
      %v1216 = vmul.f32 %v1211, %v124
      %v1217 = vmul.f32 %v1211, %v129
      %v1218 = vmul.f32 %v1211, %v134
      %v1219 = vmul.f32 %v1211, %v139
      %v1220 = vlaneseq
      %v1221 = vshrl.u32 %v1220, 7
      %v1222 = vsub.s32 6, %v1221
      %v1223 = vrot.slane %v1207, %v1222
      %v1224 = vmul.f32 %v1223, %v155
      %v1225 = vmul.f32 %v1223, %v159
      %v1226 = vmul.f32 %v1223, %v163
      %v1227 = vmul.f32 %v1223, %v167
      %v1228 = vmul.f32 %v1223, %v171
      %v1229 = vmul.f32 %v1223, %v175
      %v1230 = vmul.f32 %v1223, %v179
      %v1231 = vmul.f32 %v1223, %v183
      %v1232 = vadd.f32 %v1212, %v1224
      %v1233 = vadd.f32 %v1213, %v1225
      %v1234 = vadd.f32 %v1214, %v1226
      %v1235 = vadd.f32 %v1215, %v1227
      %v1236 = vadd.f32 %v1216, %v1228
      %v1237 = vadd.f32 %v1217, %v1229
      %v1238 = vadd.f32 %v1218, %v1230
      %v1239 = vadd.f32 %v1219, %v1231
      %1240 = vset.pattern.permute.xlu0 6
      %1241 = vperm.xlu0 %1240, %v89
      %v1242 = vpop.permute.xlu0 %1241
      %1244 = vset.pattern.permute.xlu0 6
      %1245 = vperm.xlu0 %1244, %v90
      %v1246 = vpop.permute.xlu0 %1245
      %1248 = vset.pattern.permute.xlu0 6
      %1249 = vperm.xlu0 %1248, %v91
      %v1250 = vpop.permute.xlu0 %1249
      %1252 = vset.pattern.permute.xlu0 6
      %1253 = vperm.xlu0 %1252, %v92
      %v1254 = vpop.permute.xlu0 %1253
      %1256 = vset.pattern.permute.xlu0 6
      %1257 = vperm.xlu0 %1256, %v93
      %v1258 = vpop.permute.xlu0 %1257
      %1260 = vset.pattern.permute.xlu0 6
      %1261 = vperm.xlu0 %1260, %v94
      %v1262 = vpop.permute.xlu0 %1261
      %1264 = vset.pattern.permute.xlu0 6
      %1265 = vperm.xlu0 %1264, %v95
      %v1266 = vpop.permute.xlu0 %1265
      %1268 = vset.pattern.permute.xlu0 6
      %1269 = vperm.xlu0 %1268, %v96
      %v1270 = vpop.permute.xlu0 %1269
      %v1272 = vadd.f32 %v1232, %v1242
      %v1273 = vadd.f32 %v1233, %v1246
      %v1274 = vadd.f32 %v1234, %v1250
      %v1275 = vadd.f32 %v1235, %v1254
      %v1276 = vadd.f32 %v1236, %v1258
      %v1277 = vadd.f32 %v1237, %v1262
      %v1278 = vadd.f32 %v1238, %v1266
      %v1279 = vadd.f32 %v1239, %v1270
      %v1280 = vmax.f32 %v1272, 0.0
      %v1281 = vmax.f32 %v1273, 0.0
      %v1282 = vmax.f32 %v1274, 0.0
      %v1283 = vmax.f32 %v1275, 0.0
      %v1284 = vmax.f32 %v1276, 0.0
      %v1285 = vmax.f32 %v1277, 0.0
      %v1286 = vmax.f32 %v1278, 0.0
      %v1287 = vmax.f32 %v1279, 0.0
      %1288 = vmatprep.subr.mxu0 0.0
      %1289 = vmatpush1.msra.mxu0 %v1280
      %1290 = vmatprep.subr.mxu0 0.0
      %1291 = vmatpush1.msra.mxu0 %v1281
      %1292 = vmatprep.subr.mxu0 0.0
      %1293 = vmatpush1.msra.mxu0 %v1282
      %1294 = vmatprep.subr.mxu0 0.0
      %1295 = vmatpush1.msra.mxu0 %v1283
      %1296 = vmatprep.subr.mxu0 0.0
      %1297 = vmatpush1.msra.mxu0 %v1284
      %1298 = vmatprep.subr.mxu0 0.0
      %1299 = vmatpush1.msra.mxu0 %v1285
      %1300 = vmatprep.subr.mxu0 0.0
      %1301 = vmatpush1.msra.mxu0 %v1286
      %1302 = vmatprep.subr.mxu0 0.0
      %1303 = vmatpush1.msra.mxu0 %v1287
      %1304 = vmatprep.subr.mxu0 0.0
      %1305 = vmatpush1.msra.mxu0 0.0
      %1306 = vmatprep.subr.mxu0 0.0
      %1307 = vmatpush1.msra.mxu0 0.0
      %1308 = vmatprep.subr.mxu0 0.0
      %1309 = vmatpush1.msra.mxu0 0.0
      %1310 = vmatprep.subr.mxu0 0.0
      %1311 = vmatpush1.msra.mxu0 0.0
      %1312 = vmatprep.subr.mxu0 0.0
      %1313 = vmatpush1.msra.mxu0 0.0
      %1314 = vmatprep.subr.mxu0 0.0
      %1315 = vmatpush1.msra.mxu0 0.0
      %1316 = vmatprep.subr.mxu0 0.0
      %1317 = vmatpush1.msra.mxu0 0.0
      %1318 = vmatprep.subr.mxu0 0.0
      %1319 = vmatpush1.msra.mxu0 0.0
      %1320 = vmatprep.subr.mxu0 0.0
      %1321 = vmatpush1.msra.mxu0 0.0
      %1322 = vmatprep.subr.mxu0 0.0
      %1323 = vmatpush1.msra.mxu0 0.0
      %1324 = vmatprep.subr.mxu0 0.0
      %1325 = vmatpush1.msra.mxu0 0.0
      %1326 = vmatprep.subr.mxu0 0.0
      %1327 = vmatpush1.msra.mxu0 0.0
      %1328 = vmatprep.subr.mxu0 0.0
      %1329 = vmatpush1.msra.mxu0 0.0
      %1330 = vmatprep.subr.mxu0 0.0
      %1331 = vmatpush1.msra.mxu0 0.0
      %1332 = vmatprep.subr.mxu0 0.0
      %1333 = vmatpush1.msra.mxu0 0.0
      %1334 = vmatprep.subr.mxu0 0.0
      %1335 = vmatpush1.msra.mxu0 0.0
      %1336 = vmatprep.subr.mxu0 0.0
      %1337 = vmatpush1.msra.mxu0 0.0
      %1338 = vmatprep.subr.mxu0 0.0
      %1339 = vmatpush1.msra.mxu0 0.0
      %1340 = vmatprep.subr.mxu0 0.0
      %1341 = vmatpush1.msra.mxu0 0.0
      %1342 = vmatprep.subr.mxu0 0.0
      %1343 = vmatpush1.msra.mxu0 0.0
      %1344 = vmatprep.subr.mxu0 0.0
      %1345 = vmatpush1.msra.mxu0 0.0
      %1346 = vmatprep.subr.mxu0 0.0
      %1347 = vmatpush1.msra.mxu0 0.0
      %1348 = vmatprep.subr.mxu0 0.0
      %1349 = vmatpush1.msra.mxu0 0.0
      %1350 = vmatprep.subr.mxu0 0.0
      %1351 = vmatpush1.msra.mxu0 0.0
      %1352 = vmatprep.mubr.f32.mxu0 0.0
      %1353 = vmatmul.mubr.f32.gmra.mrb[0].mxu0 %v260
      %v1354 = vpop.f32.mrb[0].mxu0
      %v1355 = vadd.f32 %v257, %v1354
      %v1356 = vpop.f32.mrb[0].mxu0
      %1357 = vdwg.mxu0
      %v1359 = vrot.slane %v1355, 2
      %v1361 = vsub.f32 %v78, %v1359
      %v1362 = vmul.f32 %v1361, %v1361
      %p1363 = scmp.lt.s32.totalorder %s1200, 10
      %s1364 = scalar_select %p1363, 1, 0
      %s1365 = scvt.s32.f32 %s1364
      %v1366 = vstv %s1365
      %v1367 = vmul.f32 %v1362, %v1366
      %v1369 = vrot.slane %v1367, 6
      %v1371 = vadd.f32 %v1199, %v1369
      %s1372 = sadd.s32 %s79, 7
      %s1373 = sld [smem:[#allocation3 + %s1372]]
      %v1374 = vstv %s1373
      %v1375 = vmul.f32 %v1374, %v76
      %s1376 = sld [smem:[#allocation6 + %s1372]]
      %v1377 = vstv %s1376
      %v1378 = vmul.f32 %v1377, %v78
      %v1379 = vadd.f32 %v1375, %v1378
      %v1380 = vlaneseq
      %v1381 = vshrl.u32 %v1380, 7
      %v1382 = vsub.s32 7, %v1381
      %v1383 = vrot.slane %v76, %v1382
      %v1384 = vmul.f32 %v1383, %v104
      %v1385 = vmul.f32 %v1383, %v109
      %v1386 = vmul.f32 %v1383, %v114
      %v1387 = vmul.f32 %v1383, %v119
      %v1388 = vmul.f32 %v1383, %v124
      %v1389 = vmul.f32 %v1383, %v129
      %v1390 = vmul.f32 %v1383, %v134
      %v1391 = vmul.f32 %v1383, %v139
      %v1392 = vlaneseq
      %v1393 = vshrl.u32 %v1392, 7
      %v1394 = vsub.s32 7, %v1393
      %v1395 = vrot.slane %v1379, %v1394
      %v1396 = vmul.f32 %v1395, %v155
      %v1397 = vmul.f32 %v1395, %v159
      %v1398 = vmul.f32 %v1395, %v163
      %v1399 = vmul.f32 %v1395, %v167
      %v1400 = vmul.f32 %v1395, %v171
      %v1401 = vmul.f32 %v1395, %v175
      %v1402 = vmul.f32 %v1395, %v179
      %v1403 = vmul.f32 %v1395, %v183
      %v1404 = vadd.f32 %v1384, %v1396
      %v1405 = vadd.f32 %v1385, %v1397
      %v1406 = vadd.f32 %v1386, %v1398
      %v1407 = vadd.f32 %v1387, %v1399
      %v1408 = vadd.f32 %v1388, %v1400
      %v1409 = vadd.f32 %v1389, %v1401
      %v1410 = vadd.f32 %v1390, %v1402
      %v1411 = vadd.f32 %v1391, %v1403
      %1412 = vset.pattern.permute.xlu0 7
      %1413 = vperm.xlu0 %1412, %v89
      %v1414 = vpop.permute.xlu0 %1413
      %1416 = vset.pattern.permute.xlu0 7
      %1417 = vperm.xlu0 %1416, %v90
      %v1418 = vpop.permute.xlu0 %1417
      %1420 = vset.pattern.permute.xlu0 7
      %1421 = vperm.xlu0 %1420, %v91
      %v1422 = vpop.permute.xlu0 %1421
      %1424 = vset.pattern.permute.xlu0 7
      %1425 = vperm.xlu0 %1424, %v92
      %v1426 = vpop.permute.xlu0 %1425
      %1428 = vset.pattern.permute.xlu0 7
      %1429 = vperm.xlu0 %1428, %v93
      %v1430 = vpop.permute.xlu0 %1429
      %1432 = vset.pattern.permute.xlu0 7
      %1433 = vperm.xlu0 %1432, %v94
      %v1434 = vpop.permute.xlu0 %1433
      %1436 = vset.pattern.permute.xlu0 7
      %1437 = vperm.xlu0 %1436, %v95
      %v1438 = vpop.permute.xlu0 %1437
      %1440 = vset.pattern.permute.xlu0 7
      %1441 = vperm.xlu0 %1440, %v96
      %v1442 = vpop.permute.xlu0 %1441
      %v1444 = vadd.f32 %v1404, %v1414
      %v1445 = vadd.f32 %v1405, %v1418
      %v1446 = vadd.f32 %v1406, %v1422
      %v1447 = vadd.f32 %v1407, %v1426
      %v1448 = vadd.f32 %v1408, %v1430
      %v1449 = vadd.f32 %v1409, %v1434
      %v1450 = vadd.f32 %v1410, %v1438
      %v1451 = vadd.f32 %v1411, %v1442
      %v1452 = vmax.f32 %v1444, 0.0
      %v1453 = vmax.f32 %v1445, 0.0
      %v1454 = vmax.f32 %v1446, 0.0
      %v1455 = vmax.f32 %v1447, 0.0
      %v1456 = vmax.f32 %v1448, 0.0
      %v1457 = vmax.f32 %v1449, 0.0
      %v1458 = vmax.f32 %v1450, 0.0
      %v1459 = vmax.f32 %v1451, 0.0
      %1460 = vmatprep.subr.mxu0 0.0
      %1461 = vmatpush1.msra.mxu0 %v1452
      %1462 = vmatprep.subr.mxu0 0.0
      %1463 = vmatpush1.msra.mxu0 %v1453
      %1464 = vmatprep.subr.mxu0 0.0
      %1465 = vmatpush1.msra.mxu0 %v1454
      %1466 = vmatprep.subr.mxu0 0.0
      %1467 = vmatpush1.msra.mxu0 %v1455
      %1468 = vmatprep.subr.mxu0 0.0
      %1469 = vmatpush1.msra.mxu0 %v1456
      %1470 = vmatprep.subr.mxu0 0.0
      %1471 = vmatpush1.msra.mxu0 %v1457
      %1472 = vmatprep.subr.mxu0 0.0
      %1473 = vmatpush1.msra.mxu0 %v1458
      %1474 = vmatprep.subr.mxu0 0.0
      %1475 = vmatpush1.msra.mxu0 %v1459
      %1476 = vmatprep.subr.mxu0 0.0
      %1477 = vmatpush1.msra.mxu0 0.0
      %1478 = vmatprep.subr.mxu0 0.0
      %1479 = vmatpush1.msra.mxu0 0.0
      %1480 = vmatprep.subr.mxu0 0.0
      %1481 = vmatpush1.msra.mxu0 0.0
      %1482 = vmatprep.subr.mxu0 0.0
      %1483 = vmatpush1.msra.mxu0 0.0
      %1484 = vmatprep.subr.mxu0 0.0
      %1485 = vmatpush1.msra.mxu0 0.0
      %1486 = vmatprep.subr.mxu0 0.0
      %1487 = vmatpush1.msra.mxu0 0.0
      %1488 = vmatprep.subr.mxu0 0.0
      %1489 = vmatpush1.msra.mxu0 0.0
      %1490 = vmatprep.subr.mxu0 0.0
      %1491 = vmatpush1.msra.mxu0 0.0
      %1492 = vmatprep.subr.mxu0 0.0
      %1493 = vmatpush1.msra.mxu0 0.0
      %1494 = vmatprep.subr.mxu0 0.0
      %1495 = vmatpush1.msra.mxu0 0.0
      %1496 = vmatprep.subr.mxu0 0.0
      %1497 = vmatpush1.msra.mxu0 0.0
      %1498 = vmatprep.subr.mxu0 0.0
      %1499 = vmatpush1.msra.mxu0 0.0
      %1500 = vmatprep.subr.mxu0 0.0
      %1501 = vmatpush1.msra.mxu0 0.0
      %1502 = vmatprep.subr.mxu0 0.0
      %1503 = vmatpush1.msra.mxu0 0.0
      %1504 = vmatprep.subr.mxu0 0.0
      %1505 = vmatpush1.msra.mxu0 0.0
      %1506 = vmatprep.subr.mxu0 0.0
      %1507 = vmatpush1.msra.mxu0 0.0
      %1508 = vmatprep.subr.mxu0 0.0
      %1509 = vmatpush1.msra.mxu0 0.0
      %1510 = vmatprep.subr.mxu0 0.0
      %1511 = vmatpush1.msra.mxu0 0.0
      %1512 = vmatprep.subr.mxu0 0.0
      %1513 = vmatpush1.msra.mxu0 0.0
      %1514 = vmatprep.subr.mxu0 0.0
      %1515 = vmatpush1.msra.mxu0 0.0
      %1516 = vmatprep.subr.mxu0 0.0
      %1517 = vmatpush1.msra.mxu0 0.0
      %1518 = vmatprep.subr.mxu0 0.0
      %1519 = vmatpush1.msra.mxu0 0.0
      %1520 = vmatprep.subr.mxu0 0.0
      %1521 = vmatpush1.msra.mxu0 0.0
      %1522 = vmatprep.subr.mxu0 0.0
      %1523 = vmatpush1.msra.mxu0 0.0
      %1524 = vmatprep.mubr.f32.mxu0 0.0
      %1525 = vmatmul.mubr.f32.gmra.mrb[0].mxu0 %v260
      %v1526 = vpop.f32.mrb[0].mxu0
      %v1527 = vadd.f32 %v257, %v1526
      %v1528 = vpop.f32.mrb[0].mxu0
      %1529 = vdwg.mxu0
      %v1531 = vrot.slane %v1527, 1
      %v1533 = vsub.f32 %v78, %v1531
      %v1534 = vmul.f32 %v1533, %v1533
      %p1535 = scmp.lt.s32.totalorder %s1372, 10
      %s1536 = scalar_select %p1535, 1, 0
      %s1537 = scvt.s32.f32 %s1536
      %v1538 = vstv %s1537
      %v1539 = vmul.f32 %v1534, %v1538
      %v1541 = vrot.slane %v1539, 7
      %v1543 = vadd.f32 %v1371, %v1541
    $region46: #{tpu_custom_call.1} parent=1 // loop_footer
      %s72 = sadd.s32 1, %s68
    $region47: #{tpu_custom_call.1} parent=1 // loop_footer_branch
      %67 = sbr.rel target = $region43
    $region48: #{tpu_custom_call.1} parent=1 // loop_exit
      _
    %v1544 = vlaneseq
    %v1545 = vshrl.u32 %v1544, 7
    %v1546 = vsub.s32 0, %v1545
    %v1547 = vrot.slane %v73, %v1546
    %1548 = vst [vmem:[#allocation8] sm:$0xff] %v1547
    // Predicated region
    $region49: #{tpu_custom_call.1} parent=1 // pred_check
      _
    $region50: #{tpu_custom_call.1} parent=1 // pred_check_branch
      %1550 = sbr.rel (0) target = $region52
    $region51: #{tpu_custom_call.1} parent=1 // pred_region
      %s1552 = ssub.s32 128, 128
      %1553 = vsyncadd [#allocation4], %s1552
      %s1555 = sshll.u32 [#allocation8], 4
      %s1556 = int_to_ptr.vmem [resolvable:$true] %s1555
      %1558 = dma.vmem_to_hbm [thread:$0]  %s1556, 128, %s8, [#allocation4]
    $region52: #{tpu_custom_call.1} parent=1 // pred_fallthru
      _
    // Predicated region
    $region53: #{tpu_custom_call.1} parent=1 // pred_check
      _
    $region54: #{tpu_custom_call.1} parent=1 // pred_check_branch
      %1560 = sbr.rel (0) target = $region56
    $region55: #{tpu_custom_call.1} parent=1 // pred_region
      %1561 = dma.done [#allocation4], 128
    $region56: #{tpu_custom_call.1} parent=1 // pred_fallthru
      _
    %1562 = vsyncpa [#allocation4], 1
    %1563 = vsyncpa [#allocation5], 1
    %1564 = vsyncpa [#allocation7], 1

</llo_original>
